<compile_context>
chip_gen: v7x
topology: tpu7x:2x2x1
jax: 0.10.0
libtpu: 0.0.40
codegen_flags: <defaults>
</compile_context>

<pallas_src>
import functools

import jax
import jax.numpy as jnp
from jax.experimental import pallas as pl
from jax.experimental.pallas import tpu as pltpu


def _bert_head_kernel(
    x_ref,                                  # (S*B, E)  time-major flattened
    w_i_ref,                                # (E, 4H)   fused [r|f|g|o] input weights
    w_h_ref,                                # (H, 4H)   fused [r|f|g|o] hidden weights
    b_g_ref,                                # (1, 4H)   fused gate bias (input + hidden)
    w_fol_ref, b_fol_ref,                   # fc_out_lstm       (H, Hd), (1, Hd)
    w_ah_ref, b_ah_ref,                     # linear_additive_h (H, V),  (1, V)
    w_as_ref, b_as_ref,                     # linear_additive_s (Hd, V), (1, V)
    w_v_ref, b_v_ref,                       # linear_vdim       (1, V),  (1, 1)  (w_v passed transposed)
    w_out_fh_ref, w_out_att_ref, b_out_ref, # fc_out_attent split: (Hd, O), (H, O), (1, O)
    rep_ref,                                # (S*B, B)  one-hot: rep[r, b]   = (r % B == b)
    sel_ref,                                # (S*B, S)  one-hot: sel[r, s]   = (r // B == s)
    rep_t_ref,                              # (B, S*B)  one-hot: rep_t[b, r] = (r % B == b)
    out_ref,                                # (B, O)
    hs_ref,                                 # scratch VMEM (S*B, H): hidden states, s-major rows
    *, seq_len, batch,
):
    f32 = jnp.float32
    S, B = seq_len, batch
    H = w_h_ref.shape[0]

    # ---- (1) Input projections for all timesteps in ONE wide MXU op --------
    # Gate biases (input + hidden) folded in, so the recurrence body has no
    # bias adds / broadcasts at all.
    xproj = (jnp.dot(x_ref[...], w_i_ref[...], preferred_element_type=f32)
             + b_g_ref[...])                                        # (S*B, 4H)

    # ---- (2) Recurrence: only h @ w_h_cat remains on the serial chain ------
    # Each step's hidden state is written straight into the VMEM scratch
    # (s-major rows), so nothing from the recurrence stays live afterwards.
    w_h = w_h_ref[...]                                              # hoisted load
    h = jnp.zeros((B, H), f32)
    c = jnp.zeros((B, H), f32)
    for i in range(S):   # static & tiny (S=8); TODO(synk): lax.fori_loop when S grows
        gates = (xproj[i * B:(i + 1) * B, :]
                 + jnp.dot(h, w_h, preferred_element_type=f32))     # (B, 4H)
        r = jax.nn.sigmoid(gates[:, 0 * H:1 * H])
        f = jax.nn.sigmoid(gates[:, 1 * H:2 * H])
        g = jnp.tanh(gates[:, 2 * H:3 * H])
        o = jax.nn.sigmoid(gates[:, 3 * H:4 * H])
        c = f * c + r * g
        h = o * jnp.tanh(c)
        hs_ref[i * B:(i + 1) * B, :] = h

    # ---- (3) Decode + additive attention, batched over the sequence --------
    final_hidden = (jnp.dot(h, w_fol_ref[...], preferred_element_type=f32)
                    + b_fol_ref[...])                               # (B, Hd)
    ws = (jnp.dot(final_hidden, w_as_ref[...], preferred_element_type=f32)
          + b_as_ref[...])                                          # (B, V)

    hs_flat = hs_ref[...]                                           # (S*B, H) from scratch
    wh = (jnp.dot(hs_flat, w_ah_ref[...], preferred_element_type=f32)
          + b_ah_ref[...])                                          # (S*B, V) one matmul

    # Broadcast ws over the sequence with one tiny one-hot matmul — no S
    # tiled copies of the (B, V) tile.
    ws_full = jnp.dot(rep_ref[...], ws, preferred_element_type=f32)  # (S*B, V)
    t = jnp.tanh(wh + ws_full)

    # Score: one lane-reduce over V instead of S width-1 matmuls ...
    score_col = (jnp.sum(t * w_v_ref[...], axis=-1, keepdims=True)
                 + b_v_ref[...])                                    # (S*B, 1)
    # ... gathered lane-dense to (B, S) with a single one-hot contraction
    # (instead of S lane-masked slice+concats), so the softmax reduces along
    # lanes.
    score = jnp.dot(rep_t_ref[...], score_col * sel_ref[...],
                    preferred_element_type=f32)                     # (B, S)

    m = jnp.max(score, axis=-1, keepdims=True)
    e = jnp.exp(score - m)
    denom = jnp.sum(e, axis=-1, keepdims=True)
    attn = e * pl.reciprocal(denom, approx=False)                   # exact: keeps 1e-3 parity

    # attention_output = sum_s attn[:, s] * hidden[s]  (S tiny VPU fmas,
    # reading per-step rows from the scratch; fine at S=8).
    attn_out = jnp.zeros((B, H), f32)
    for i in range(S):
        attn_out = attn_out + attn[:, i:i + 1] * hs_ref[i * B:(i + 1) * B, :]

    # fc_out_attent over concat([final_hidden, attention_output], dim=1),
    # expressed as a split matmul (weight split in the wrapper).
    out = (jnp.dot(final_hidden, w_out_fh_ref[...], preferred_element_type=f32)
           + jnp.dot(attn_out, w_out_att_ref[...], preferred_element_type=f32)
           + b_out_ref[...])
    out_ref[...] = jax.nn.sigmoid(out)


def bert_head_forward(text_fea, params):
    """text_fea: (B, S, E) float32 -- the encoder's last_hidden_state."""
    B, S, E = text_fea.shape
    H = params["w_hr"].shape[0]
    n_output = params["b_out"].shape[-1]

    # Time-major, row-flattened: row s*B + b == embedded_words[s][b].
    # TODO(synk): at realistic shapes express this permute via a BlockSpec
    # index_map over a grid instead of materializing a transposed copy.
    x_flat = jnp.transpose(text_fea, (1, 0, 2)).reshape(S * B, E)

    # Fuse the four gate weight matrices / biases (done once, outside the kernel).
    w_i_cat = jnp.concatenate(
        [params["w_ir"], params["w_if"], params["w_ig"], params["w_io"]], axis=1)   # (E, 4H)
    w_h_cat = jnp.concatenate(
        [params["w_hr"], params["w_hf"], params["w_hg"], params["w_ho"]], axis=1)   # (H, 4H)
    b_g_cat = jnp.concatenate(
        [params["b_ir"] + params["b_hr"], params["b_if"] + params["b_hf"],
         params["b_ig"] + params["b_hg"], params["b_io"] + params["b_ho"]], axis=1)  # (1, 4H)
    w_v_t = jnp.transpose(params["w_v"])                                             # (1, V)

    # Tiny one-hot selector constants (computed once, passed as inputs).
    rows = jnp.arange(S * B)
    rep = (rows[:, None] % B == jnp.arange(B)[None, :]).astype(jnp.float32)   # (S*B, B)
    sel = (rows[:, None] // B == jnp.arange(S)[None, :]).astype(jnp.float32)  # (S*B, S)
    rep_t = jnp.transpose(rep)                                                # (B, S*B)

    args = (
        x_flat, w_i_cat, w_h_cat, b_g_cat,
        params["w_fol"], params["b_fol"],
        params["w_ah"], params["b_ah"],
        params["w_as"], params["b_as"],
        w_v_t, params["b_v"],
        params["w_out_fh"], params["w_out_att"], params["b_out"],
        rep, sel, rep_t,
    )
    kernel = functools.partial(_bert_head_kernel, seq_len=S, batch=B)
    return pl.pallas_call(
        kernel,
        out_shape=jax.ShapeDtypeStruct((B, n_output), jnp.float32),
        in_specs=[pl.BlockSpec(memory_space=pltpu.MemorySpace.VMEM)] * len(args),
        out_specs=pl.BlockSpec(memory_space=pltpu.MemorySpace.VMEM),
        scratch_shapes=[pltpu.VMEM((S * B, H), jnp.float32)],
    )(*args)


def init_params(key, n_embed, hidden, hidden_decode, n_output, v_dim):
    keys = iter(jax.random.split(key, 64))

    def linear(in_f, out_f):
        bound = 1.0 / float(in_f) ** 0.5        # PyTorch nn.Linear default init
        w = jax.random.uniform(next(keys), (in_f, out_f), jnp.float32, -bound, bound)
        b = jax.random.uniform(next(keys), (1, out_f), jnp.float32, -bound, bound)
        return w, b

    p = {}
    for g in ("r", "f", "g", "o"):
        p[f"w_i{g}"], p[f"b_i{g}"] = linear(n_embed, hidden)
        p[f"w_h{g}"], p[f"b_h{g}"] = linear(hidden, hidden)
    p["w_fol"], p["b_fol"] = linear(hidden, hidden_decode)
    p["w_ah"], p["b_ah"] = linear(hidden, v_dim)
    p["w_as"], p["b_as"] = linear(hidden_decode, v_dim)
    p["w_v"], p["b_v"] = linear(v_dim, 1)
    w_out, b_out = linear(hidden + hidden_decode, n_output)
    # torch forward concatenates [final_hidden (Hd), attention_output (H)]
    p["w_out_fh"] = w_out[:hidden_decode]
    p["w_out_att"] = w_out[hidden_decode:]
    p["b_out"] = b_out
    return p


def reference_forward(text_fea, params):
    """Pure-JAX reference mirroring the PyTorch forward (post-encoder)."""
    B, S, E = text_fea.shape
    x = jnp.transpose(text_fea, (1, 0, 2))
    H = params["w_hr"].shape[0]
    hidden = jnp.zeros((B, H), jnp.float32)
    c = jnp.zeros((B, H), jnp.float32)
    lin = lambda v, w, b: v @ params[w] + params[b]
    hs = []
    for i in range(S):
        xi = x[i]
        rt = jax.nn.sigmoid(lin(xi, "w_ir", "b_ir") + lin(hidden, "w_hr", "b_hr"))
        fft = jax.nn.sigmoid(lin(xi, "w_if", "b_if") + lin(hidden, "w_hf", "b_hf"))
        gt = jnp.tanh(lin(xi, "w_ig", "b_ig") + lin(hidden, "w_hg", "b_hg"))
        ot = jax.nn.sigmoid(lin(xi, "w_io", "b_io") + lin(hidden, "w_ho", "b_ho"))
        c = fft * c + rt * gt
        hidden = ot * jnp.tanh(c)
        hs.append(hidden)
    final_hidden = lin(hidden, "w_fol", "b_fol")
    outputs = jnp.stack(hs, axis=1)                                     # (B, S, H)
    WH = outputs @ params["w_ah"] + params["b_ah"]
    WS = (final_hidden @ params["w_as"] + params["b_as"])[:, None, :]
    score = (jnp.tanh(WH + WS) @ params["w_v"] + params["b_v"])[..., 0]  # (B, S)
    attn = jax.nn.softmax(score, axis=1)
    attn_out = jnp.einsum("bsh,bs->bh", outputs, attn)
    out = (final_hidden @ params["w_out_fh"] + attn_out @ params["w_out_att"]
           + params["b_out"])
    return jax.nn.sigmoid(out)


if __name__ == "__main__":
    B, S = 2, 8
    n_embed, hidden_node, hidden_node_decode = 32, 32, 16
    n_output, v_attention_dimensionality = 2, 16

    key = jax.random.PRNGKey(0)
    k_feat, k_param = jax.random.split(key)
    # synthetic stand-in for encoder(text).last_hidden_state
    text_fea = jax.random.normal(k_feat, (B, S, n_embed), jnp.float32)
    params = init_params(k_param, n_embed, hidden_node, hidden_node_decode,
                         n_output, v_attention_dimensionality)

    out = bert_head_forward(text_fea, params)
    out = jax.block_until_ready(out)

    ref = reference_forward(text_fea, params)
    assert out.shape == (B, n_output)
    assert jnp.allclose(out, ref, rtol=1e-3, atol=1e-3), (out, ref)
    print("KERNEL_OK")
</pallas_src>

<mosaic_0001>
module attributes {stable_mosaic.version = 11 : i64} {
  func.func @_bert_head_kernel(%arg0: memref<16x32xf32, #tpu.memory_space<vmem>>, %arg1: memref<32x128xf32, #tpu.memory_space<vmem>>, %arg2: memref<32x128xf32, #tpu.memory_space<vmem>>, %arg3: memref<1x128xf32, #tpu.memory_space<vmem>>, %arg4: memref<32x16xf32, #tpu.memory_space<vmem>>, %arg5: memref<1x16xf32, #tpu.memory_space<vmem>>, %arg6: memref<32x16xf32, #tpu.memory_space<vmem>>, %arg7: memref<1x16xf32, #tpu.memory_space<vmem>>, %arg8: memref<16x16xf32, #tpu.memory_space<vmem>>, %arg9: memref<1x16xf32, #tpu.memory_space<vmem>>, %arg10: memref<1x16xf32, #tpu.memory_space<vmem>>, %arg11: memref<1x1xf32, #tpu.memory_space<vmem>>, %arg12: memref<16x2xf32, #tpu.memory_space<vmem>>, %arg13: memref<32x2xf32, #tpu.memory_space<vmem>>, %arg14: memref<1x2xf32, #tpu.memory_space<vmem>>, %arg15: memref<16x2xf32, #tpu.memory_space<vmem>>, %arg16: memref<16x8xf32, #tpu.memory_space<vmem>>, %arg17: memref<2x16xf32, #tpu.memory_space<vmem>>, %arg18: memref<2x2xf32, #tpu.memory_space<vmem>>, %arg19: memref<16x32xf32, #tpu.memory_space<vmem>>) attributes {dimension_semantics = [], scalar_prefetch = 0 : i64, scratch_operands = 1 : i64, tpu.core_type = #tpu.core_type<tc>} {
    %c0 = arith.constant 0 : index
    %c0_0 = arith.constant 0 : index
    %0 = vector.load %arg0[%c0, %c0_0] : memref<16x32xf32, #tpu.memory_space<vmem>>, vector<16x32xf32>
    %c0_1 = arith.constant 0 : index
    %c0_2 = arith.constant 0 : index
    %1 = vector.load %arg1[%c0_1, %c0_2] : memref<32x128xf32, #tpu.memory_space<vmem>>, vector<32x128xf32>
    %cst = arith.constant dense<0.000000e+00> : vector<16x128xf32>
    %2 = tpu.matmul %0, %1, %cst {dimension_numbers = #tpu.dot_dimension_numbers<[1], [0], [0], [1], [0, 0, 1, 1], [], []>} : vector<16x32xf32>, vector<32x128xf32>, vector<16x128xf32> -> vector<16x128xf32>
    %c0_3 = arith.constant 0 : index
    %c0_4 = arith.constant 0 : index
    %3 = vector.load %arg3[%c0_3, %c0_4] : memref<1x128xf32, #tpu.memory_space<vmem>>, vector<1x128xf32>
    %4 = vector.broadcast %3 : vector<1x128xf32> to vector<16x128xf32>
    %5 = arith.addf %2, %4 : vector<16x128xf32>
    %c0_5 = arith.constant 0 : index
    %c0_6 = arith.constant 0 : index
    %6 = vector.load %arg2[%c0_5, %c0_6] : memref<32x128xf32, #tpu.memory_space<vmem>>, vector<32x128xf32>
    %cst_7 = arith.constant 0.000000e+00 : f32
    %7 = vector.broadcast %cst_7 : f32 to vector<2x32xf32>
    %cst_8 = arith.constant 0.000000e+00 : f32
    %8 = vector.broadcast %cst_8 : f32 to vector<2x32xf32>
    %9 = vector.extract_strided_slice %5 {offsets = [0, 0], sizes = [2, 128], strides = [1, 1]} : vector<16x128xf32> to vector<2x128xf32>
    %cst_9 = arith.constant dense<0.000000e+00> : vector<2x128xf32>
    %10 = tpu.matmul %7, %6, %cst_9 {dimension_numbers = #tpu.dot_dimension_numbers<[1], [0], [0], [1], [0, 0, 1, 1], [], []>} : vector<2x32xf32>, vector<32x128xf32>, vector<2x128xf32> -> vector<2x128xf32>
    %11 = arith.addf %9, %10 : vector<2x128xf32>
    %12 = vector.extract_strided_slice %11 {offsets = [0, 0], sizes = [2, 32], strides = [1, 1]} : vector<2x128xf32> to vector<2x32xf32>
    %13 = arith.negf %12 : vector<2x32xf32>
    %14 = math.exp %13 : vector<2x32xf32>
    %cst_10 = arith.constant 1.000000e+00 : f32
    %15 = vector.broadcast %cst_10 : f32 to vector<2x32xf32>
    %16 = arith.addf %15, %14 : vector<2x32xf32>
    %17 = arith.divf %15, %16 : vector<2x32xf32>
    %18 = vector.extract_strided_slice %11 {offsets = [0, 32], sizes = [2, 32], strides = [1, 1]} : vector<2x128xf32> to vector<2x32xf32>
    %19 = arith.negf %18 : vector<2x32xf32>
    %20 = math.exp %19 : vector<2x32xf32>
    %cst_11 = arith.constant 1.000000e+00 : f32
    %21 = vector.broadcast %cst_11 : f32 to vector<2x32xf32>
    %22 = arith.addf %21, %20 : vector<2x32xf32>
    %23 = arith.divf %21, %22 : vector<2x32xf32>
    %24 = vector.extract_strided_slice %11 {offsets = [0, 64], sizes = [2, 32], strides = [1, 1]} : vector<2x128xf32> to vector<2x32xf32>
    %25 = math.tanh %24 : vector<2x32xf32>
    %26 = vector.extract_strided_slice %11 {offsets = [0, 96], sizes = [2, 32], strides = [1, 1]} : vector<2x128xf32> to vector<2x32xf32>
    %27 = arith.negf %26 : vector<2x32xf32>
    %28 = math.exp %27 : vector<2x32xf32>
    %cst_12 = arith.constant 1.000000e+00 : f32
    %29 = vector.broadcast %cst_12 : f32 to vector<2x32xf32>
    %30 = arith.addf %29, %28 : vector<2x32xf32>
    %31 = arith.divf %29, %30 : vector<2x32xf32>
    %32 = arith.mulf %23, %8 : vector<2x32xf32>
    %33 = arith.mulf %17, %25 : vector<2x32xf32>
    %34 = arith.addf %32, %33 : vector<2x32xf32>
    %35 = math.tanh %34 : vector<2x32xf32>
    %36 = arith.mulf %31, %35 : vector<2x32xf32>
    %c0_13 = arith.constant 0 : index
    %c0_14 = arith.constant 0 : index
    %37 = vector.load %arg19[%c0_13, %c0_14] : memref<16x32xf32, #tpu.memory_space<vmem>>, vector<2x32xf32>
    tpu.vector_store %arg19[%c0_13, %c0_14], %36 {strides = array<i32>} : memref<16x32xf32, #tpu.memory_space<vmem>>, vector<2x32xf32>,
    %38 = vector.extract_strided_slice %5 {offsets = [2, 0], sizes = [2, 128], strides = [1, 1]} : vector<16x128xf32> to vector<2x128xf32>
    %cst_15 = arith.constant dense<0.000000e+00> : vector<2x128xf32>
    %39 = tpu.matmul %36, %6, %cst_15 {dimension_numbers = #tpu.dot_dimension_numbers<[1], [0], [0], [1], [0, 0, 1, 1], [], []>} : vector<2x32xf32>, vector<32x128xf32>, vector<2x128xf32> -> vector<2x128xf32>
    %40 = arith.addf %38, %39 : vector<2x128xf32>
    %41 = vector.extract_strided_slice %40 {offsets = [0, 0], sizes = [2, 32], strides = [1, 1]} : vector<2x128xf32> to vector<2x32xf32>
    %42 = arith.negf %41 : vector<2x32xf32>
    %43 = math.exp %42 : vector<2x32xf32>
    %cst_16 = arith.constant 1.000000e+00 : f32
    %44 = vector.broadcast %cst_16 : f32 to vector<2x32xf32>
    %45 = arith.addf %44, %43 : vector<2x32xf32>
    %46 = arith.divf %44, %45 : vector<2x32xf32>
    %47 = vector.extract_strided_slice %40 {offsets = [0, 32], sizes = [2, 32], strides = [1, 1]} : vector<2x128xf32> to vector<2x32xf32>
    %48 = arith.negf %47 : vector<2x32xf32>
    %49 = math.exp %48 : vector<2x32xf32>
    %cst_17 = arith.constant 1.000000e+00 : f32
    %50 = vector.broadcast %cst_17 : f32 to vector<2x32xf32>
    %51 = arith.addf %50, %49 : vector<2x32xf32>
    %52 = arith.divf %50, %51 : vector<2x32xf32>
    %53 = vector.extract_strided_slice %40 {offsets = [0, 64], sizes = [2, 32], strides = [1, 1]} : vector<2x128xf32> to vector<2x32xf32>
    %54 = math.tanh %53 : vector<2x32xf32>
    %55 = vector.extract_strided_slice %40 {offsets = [0, 96], sizes = [2, 32], strides = [1, 1]} : vector<2x128xf32> to vector<2x32xf32>
    %56 = arith.negf %55 : vector<2x32xf32>
    %57 = math.exp %56 : vector<2x32xf32>
    %cst_18 = arith.constant 1.000000e+00 : f32
    %58 = vector.broadcast %cst_18 : f32 to vector<2x32xf32>
    %59 = arith.addf %58, %57 : vector<2x32xf32>
    %60 = arith.divf %58, %59 : vector<2x32xf32>
    %61 = arith.mulf %52, %34 : vector<2x32xf32>
    %62 = arith.mulf %46, %54 : vector<2x32xf32>
    %63 = arith.addf %61, %62 : vector<2x32xf32>
    %64 = math.tanh %63 : vector<2x32xf32>
    %65 = arith.mulf %60, %64 : vector<2x32xf32>
    %c2 = arith.constant 2 : index
    %c0_19 = arith.constant 0 : index
    %66 = vector.load %arg19[%c2, %c0_19] : memref<16x32xf32, #tpu.memory_space<vmem>>, vector<2x32xf32>
    tpu.vector_store %arg19[%c2, %c0_19], %65 {strides = array<i32>} : memref<16x32xf32, #tpu.memory_space<vmem>>, vector<2x32xf32>,
    %67 = vector.extract_strided_slice %5 {offsets = [4, 0], sizes = [2, 128], strides = [1, 1]} : vector<16x128xf32> to vector<2x128xf32>
    %cst_20 = arith.constant dense<0.000000e+00> : vector<2x128xf32>
    %68 = tpu.matmul %65, %6, %cst_20 {dimension_numbers = #tpu.dot_dimension_numbers<[1], [0], [0], [1], [0, 0, 1, 1], [], []>} : vector<2x32xf32>, vector<32x128xf32>, vector<2x128xf32> -> vector<2x128xf32>
    %69 = arith.addf %67, %68 : vector<2x128xf32>
    %70 = vector.extract_strided_slice %69 {offsets = [0, 0], sizes = [2, 32], strides = [1, 1]} : vector<2x128xf32> to vector<2x32xf32>
    %71 = arith.negf %70 : vector<2x32xf32>
    %72 = math.exp %71 : vector<2x32xf32>
    %cst_21 = arith.constant 1.000000e+00 : f32
    %73 = vector.broadcast %cst_21 : f32 to vector<2x32xf32>
    %74 = arith.addf %73, %72 : vector<2x32xf32>
    %75 = arith.divf %73, %74 : vector<2x32xf32>
    %76 = vector.extract_strided_slice %69 {offsets = [0, 32], sizes = [2, 32], strides = [1, 1]} : vector<2x128xf32> to vector<2x32xf32>
    %77 = arith.negf %76 : vector<2x32xf32>
    %78 = math.exp %77 : vector<2x32xf32>
    %cst_22 = arith.constant 1.000000e+00 : f32
    %79 = vector.broadcast %cst_22 : f32 to vector<2x32xf32>
    %80 = arith.addf %79, %78 : vector<2x32xf32>
    %81 = arith.divf %79, %80 : vector<2x32xf32>
    %82 = vector.extract_strided_slice %69 {offsets = [0, 64], sizes = [2, 32], strides = [1, 1]} : vector<2x128xf32> to vector<2x32xf32>
    %83 = math.tanh %82 : vector<2x32xf32>
    %84 = vector.extract_strided_slice %69 {offsets = [0, 96], sizes = [2, 32], strides = [1, 1]} : vector<2x128xf32> to vector<2x32xf32>
    %85 = arith.negf %84 : vector<2x32xf32>
    %86 = math.exp %85 : vector<2x32xf32>
    %cst_23 = arith.constant 1.000000e+00 : f32
    %87 = vector.broadcast %cst_23 : f32 to vector<2x32xf32>
    %88 = arith.addf %87, %86 : vector<2x32xf32>
    %89 = arith.divf %87, %88 : vector<2x32xf32>
    %90 = arith.mulf %81, %63 : vector<2x32xf32>
    %91 = arith.mulf %75, %83 : vector<2x32xf32>
    %92 = arith.addf %90, %91 : vector<2x32xf32>
    %93 = math.tanh %92 : vector<2x32xf32>
    %94 = arith.mulf %89, %93 : vector<2x32xf32>
    %c4 = arith.constant 4 : index
    %c0_24 = arith.constant 0 : index
    %95 = vector.load %arg19[%c4, %c0_24] : memref<16x32xf32, #tpu.memory_space<vmem>>, vector<2x32xf32>
    tpu.vector_store %arg19[%c4, %c0_24], %94 {strides = array<i32>} : memref<16x32xf32, #tpu.memory_space<vmem>>, vector<2x32xf32>,
    %96 = vector.extract_strided_slice %5 {offsets = [6, 0], sizes = [2, 128], strides = [1, 1]} : vector<16x128xf32> to vector<2x128xf32>
    %cst_25 = arith.constant dense<0.000000e+00> : vector<2x128xf32>
    %97 = tpu.matmul %94, %6, %cst_25 {dimension_numbers = #tpu.dot_dimension_numbers<[1], [0], [0], [1], [0, 0, 1, 1], [], []>} : vector<2x32xf32>, vector<32x128xf32>, vector<2x128xf32> -> vector<2x128xf32>
    %98 = arith.addf %96, %97 : vector<2x128xf32>
    %99 = vector.extract_strided_slice %98 {offsets = [0, 0], sizes = [2, 32], strides = [1, 1]} : vector<2x128xf32> to vector<2x32xf32>
    %100 = arith.negf %99 : vector<2x32xf32>
    %101 = math.exp %100 : vector<2x32xf32>
    %cst_26 = arith.constant 1.000000e+00 : f32
    %102 = vector.broadcast %cst_26 : f32 to vector<2x32xf32>
    %103 = arith.addf %102, %101 : vector<2x32xf32>
    %104 = arith.divf %102, %103 : vector<2x32xf32>
    %105 = vector.extract_strided_slice %98 {offsets = [0, 32], sizes = [2, 32], strides = [1, 1]} : vector<2x128xf32> to vector<2x32xf32>
    %106 = arith.negf %105 : vector<2x32xf32>
    %107 = math.exp %106 : vector<2x32xf32>
    %cst_27 = arith.constant 1.000000e+00 : f32
    %108 = vector.broadcast %cst_27 : f32 to vector<2x32xf32>
    %109 = arith.addf %108, %107 : vector<2x32xf32>
    %110 = arith.divf %108, %109 : vector<2x32xf32>
    %111 = vector.extract_strided_slice %98 {offsets = [0, 64], sizes = [2, 32], strides = [1, 1]} : vector<2x128xf32> to vector<2x32xf32>
    %112 = math.tanh %111 : vector<2x32xf32>
    %113 = vector.extract_strided_slice %98 {offsets = [0, 96], sizes = [2, 32], strides = [1, 1]} : vector<2x128xf32> to vector<2x32xf32>
    %114 = arith.negf %113 : vector<2x32xf32>
    %115 = math.exp %114 : vector<2x32xf32>
    %cst_28 = arith.constant 1.000000e+00 : f32
    %116 = vector.broadcast %cst_28 : f32 to vector<2x32xf32>
    %117 = arith.addf %116, %115 : vector<2x32xf32>
    %118 = arith.divf %116, %117 : vector<2x32xf32>
    %119 = arith.mulf %110, %92 : vector<2x32xf32>
    %120 = arith.mulf %104, %112 : vector<2x32xf32>
    %121 = arith.addf %119, %120 : vector<2x32xf32>
    %122 = math.tanh %121 : vector<2x32xf32>
    %123 = arith.mulf %118, %122 : vector<2x32xf32>
    %c6 = arith.constant 6 : index
    %c0_29 = arith.constant 0 : index
    %124 = vector.load %arg19[%c6, %c0_29] : memref<16x32xf32, #tpu.memory_space<vmem>>, vector<2x32xf32>
    tpu.vector_store %arg19[%c6, %c0_29], %123 {strides = array<i32>} : memref<16x32xf32, #tpu.memory_space<vmem>>, vector<2x32xf32>,
    %125 = vector.extract_strided_slice %5 {offsets = [8, 0], sizes = [2, 128], strides = [1, 1]} : vector<16x128xf32> to vector<2x128xf32>
    %cst_30 = arith.constant dense<0.000000e+00> : vector<2x128xf32>
    %126 = tpu.matmul %123, %6, %cst_30 {dimension_numbers = #tpu.dot_dimension_numbers<[1], [0], [0], [1], [0, 0, 1, 1], [], []>} : vector<2x32xf32>, vector<32x128xf32>, vector<2x128xf32> -> vector<2x128xf32>
    %127 = arith.addf %125, %126 : vector<2x128xf32>
    %128 = vector.extract_strided_slice %127 {offsets = [0, 0], sizes = [2, 32], strides = [1, 1]} : vector<2x128xf32> to vector<2x32xf32>
    %129 = arith.negf %128 : vector<2x32xf32>
    %130 = math.exp %129 : vector<2x32xf32>
    %cst_31 = arith.constant 1.000000e+00 : f32
    %131 = vector.broadcast %cst_31 : f32 to vector<2x32xf32>
    %132 = arith.addf %131, %130 : vector<2x32xf32>
    %133 = arith.divf %131, %132 : vector<2x32xf32>
    %134 = vector.extract_strided_slice %127 {offsets = [0, 32], sizes = [2, 32], strides = [1, 1]} : vector<2x128xf32> to vector<2x32xf32>
    %135 = arith.negf %134 : vector<2x32xf32>
    %136 = math.exp %135 : vector<2x32xf32>
    %cst_32 = arith.constant 1.000000e+00 : f32
    %137 = vector.broadcast %cst_32 : f32 to vector<2x32xf32>
    %138 = arith.addf %137, %136 : vector<2x32xf32>
    %139 = arith.divf %137, %138 : vector<2x32xf32>
    %140 = vector.extract_strided_slice %127 {offsets = [0, 64], sizes = [2, 32], strides = [1, 1]} : vector<2x128xf32> to vector<2x32xf32>
    %141 = math.tanh %140 : vector<2x32xf32>
    %142 = vector.extract_strided_slice %127 {offsets = [0, 96], sizes = [2, 32], strides = [1, 1]} : vector<2x128xf32> to vector<2x32xf32>
    %143 = arith.negf %142 : vector<2x32xf32>
    %144 = math.exp %143 : vector<2x32xf32>
    %cst_33 = arith.constant 1.000000e+00 : f32
    %145 = vector.broadcast %cst_33 : f32 to vector<2x32xf32>
    %146 = arith.addf %145, %144 : vector<2x32xf32>
    %147 = arith.divf %145, %146 : vector<2x32xf32>
    %148 = arith.mulf %139, %121 : vector<2x32xf32>
    %149 = arith.mulf %133, %141 : vector<2x32xf32>
    %150 = arith.addf %148, %149 : vector<2x32xf32>
    %151 = math.tanh %150 : vector<2x32xf32>
    %152 = arith.mulf %147, %151 : vector<2x32xf32>
    %c8 = arith.constant 8 : index
    %c0_34 = arith.constant 0 : index
    %153 = vector.load %arg19[%c8, %c0_34] : memref<16x32xf32, #tpu.memory_space<vmem>>, vector<2x32xf32>
    tpu.vector_store %arg19[%c8, %c0_34], %152 {strides = array<i32>} : memref<16x32xf32, #tpu.memory_space<vmem>>, vector<2x32xf32>,
    %154 = vector.extract_strided_slice %5 {offsets = [10, 0], sizes = [2, 128], strides = [1, 1]} : vector<16x128xf32> to vector<2x128xf32>
    %cst_35 = arith.constant dense<0.000000e+00> : vector<2x128xf32>
    %155 = tpu.matmul %152, %6, %cst_35 {dimension_numbers = #tpu.dot_dimension_numbers<[1], [0], [0], [1], [0, 0, 1, 1], [], []>} : vector<2x32xf32>, vector<32x128xf32>, vector<2x128xf32> -> vector<2x128xf32>
    %156 = arith.addf %154, %155 : vector<2x128xf32>
    %157 = vector.extract_strided_slice %156 {offsets = [0, 0], sizes = [2, 32], strides = [1, 1]} : vector<2x128xf32> to vector<2x32xf32>
    %158 = arith.negf %157 : vector<2x32xf32>
    %159 = math.exp %158 : vector<2x32xf32>
    %cst_36 = arith.constant 1.000000e+00 : f32
    %160 = vector.broadcast %cst_36 : f32 to vector<2x32xf32>
    %161 = arith.addf %160, %159 : vector<2x32xf32>
    %162 = arith.divf %160, %161 : vector<2x32xf32>
    %163 = vector.extract_strided_slice %156 {offsets = [0, 32], sizes = [2, 32], strides = [1, 1]} : vector<2x128xf32> to vector<2x32xf32>
    %164 = arith.negf %163 : vector<2x32xf32>
    %165 = math.exp %164 : vector<2x32xf32>
    %cst_37 = arith.constant 1.000000e+00 : f32
    %166 = vector.broadcast %cst_37 : f32 to vector<2x32xf32>
    %167 = arith.addf %166, %165 : vector<2x32xf32>
    %168 = arith.divf %166, %167 : vector<2x32xf32>
    %169 = vector.extract_strided_slice %156 {offsets = [0, 64], sizes = [2, 32], strides = [1, 1]} : vector<2x128xf32> to vector<2x32xf32>
    %170 = math.tanh %169 : vector<2x32xf32>
    %171 = vector.extract_strided_slice %156 {offsets = [0, 96], sizes = [2, 32], strides = [1, 1]} : vector<2x128xf32> to vector<2x32xf32>
    %172 = arith.negf %171 : vector<2x32xf32>
    %173 = math.exp %172 : vector<2x32xf32>
    %cst_38 = arith.constant 1.000000e+00 : f32
    %174 = vector.broadcast %cst_38 : f32 to vector<2x32xf32>
    %175 = arith.addf %174, %173 : vector<2x32xf32>
    %176 = arith.divf %174, %175 : vector<2x32xf32>
    %177 = arith.mulf %168, %150 : vector<2x32xf32>
    %178 = arith.mulf %162, %170 : vector<2x32xf32>
    %179 = arith.addf %177, %178 : vector<2x32xf32>
    %180 = math.tanh %179 : vector<2x32xf32>
    %181 = arith.mulf %176, %180 : vector<2x32xf32>
    %c10 = arith.constant 10 : index
    %c0_39 = arith.constant 0 : index
    %182 = vector.load %arg19[%c10, %c0_39] : memref<16x32xf32, #tpu.memory_space<vmem>>, vector<2x32xf32>
    tpu.vector_store %arg19[%c10, %c0_39], %181 {strides = array<i32>} : memref<16x32xf32, #tpu.memory_space<vmem>>, vector<2x32xf32>,
    %183 = vector.extract_strided_slice %5 {offsets = [12, 0], sizes = [2, 128], strides = [1, 1]} : vector<16x128xf32> to vector<2x128xf32>
    %cst_40 = arith.constant dense<0.000000e+00> : vector<2x128xf32>
    %184 = tpu.matmul %181, %6, %cst_40 {dimension_numbers = #tpu.dot_dimension_numbers<[1], [0], [0], [1], [0, 0, 1, 1], [], []>} : vector<2x32xf32>, vector<32x128xf32>, vector<2x128xf32> -> vector<2x128xf32>
    %185 = arith.addf %183, %184 : vector<2x128xf32>
    %186 = vector.extract_strided_slice %185 {offsets = [0, 0], sizes = [2, 32], strides = [1, 1]} : vector<2x128xf32> to vector<2x32xf32>
    %187 = arith.negf %186 : vector<2x32xf32>
    %188 = math.exp %187 : vector<2x32xf32>
    %cst_41 = arith.constant 1.000000e+00 : f32
    %189 = vector.broadcast %cst_41 : f32 to vector<2x32xf32>
    %190 = arith.addf %189, %188 : vector<2x32xf32>
    %191 = arith.divf %189, %190 : vector<2x32xf32>
    %192 = vector.extract_strided_slice %185 {offsets = [0, 32], sizes = [2, 32], strides = [1, 1]} : vector<2x128xf32> to vector<2x32xf32>
    %193 = arith.negf %192 : vector<2x32xf32>
    %194 = math.exp %193 : vector<2x32xf32>
    %cst_42 = arith.constant 1.000000e+00 : f32
    %195 = vector.broadcast %cst_42 : f32 to vector<2x32xf32>
    %196 = arith.addf %195, %194 : vector<2x32xf32>
    %197 = arith.divf %195, %196 : vector<2x32xf32>
    %198 = vector.extract_strided_slice %185 {offsets = [0, 64], sizes = [2, 32], strides = [1, 1]} : vector<2x128xf32> to vector<2x32xf32>
    %199 = math.tanh %198 : vector<2x32xf32>
    %200 = vector.extract_strided_slice %185 {offsets = [0, 96], sizes = [2, 32], strides = [1, 1]} : vector<2x128xf32> to vector<2x32xf32>
    %201 = arith.negf %200 : vector<2x32xf32>
    %202 = math.exp %201 : vector<2x32xf32>
    %cst_43 = arith.constant 1.000000e+00 : f32
    %203 = vector.broadcast %cst_43 : f32 to vector<2x32xf32>
    %204 = arith.addf %203, %202 : vector<2x32xf32>
    %205 = arith.divf %203, %204 : vector<2x32xf32>
    %206 = arith.mulf %197, %179 : vector<2x32xf32>
    %207 = arith.mulf %191, %199 : vector<2x32xf32>
    %208 = arith.addf %206, %207 : vector<2x32xf32>
    %209 = math.tanh %208 : vector<2x32xf32>
    %210 = arith.mulf %205, %209 : vector<2x32xf32>
    %c12 = arith.constant 12 : index
    %c0_44 = arith.constant 0 : index
    %211 = vector.load %arg19[%c12, %c0_44] : memref<16x32xf32, #tpu.memory_space<vmem>>, vector<2x32xf32>
    tpu.vector_store %arg19[%c12, %c0_44], %210 {strides = array<i32>} : memref<16x32xf32, #tpu.memory_space<vmem>>, vector<2x32xf32>,
    %212 = vector.extract_strided_slice %5 {offsets = [14, 0], sizes = [2, 128], strides = [1, 1]} : vector<16x128xf32> to vector<2x128xf32>
    %cst_45 = arith.constant dense<0.000000e+00> : vector<2x128xf32>
    %213 = tpu.matmul %210, %6, %cst_45 {dimension_numbers = #tpu.dot_dimension_numbers<[1], [0], [0], [1], [0, 0, 1, 1], [], []>} : vector<2x32xf32>, vector<32x128xf32>, vector<2x128xf32> -> vector<2x128xf32>
    %214 = arith.addf %212, %213 : vector<2x128xf32>
    %215 = vector.extract_strided_slice %214 {offsets = [0, 0], sizes = [2, 32], strides = [1, 1]} : vector<2x128xf32> to vector<2x32xf32>
    %216 = arith.negf %215 : vector<2x32xf32>
    %217 = math.exp %216 : vector<2x32xf32>
    %cst_46 = arith.constant 1.000000e+00 : f32
    %218 = vector.broadcast %cst_46 : f32 to vector<2x32xf32>
    %219 = arith.addf %218, %217 : vector<2x32xf32>
    %220 = arith.divf %218, %219 : vector<2x32xf32>
    %221 = vector.extract_strided_slice %214 {offsets = [0, 32], sizes = [2, 32], strides = [1, 1]} : vector<2x128xf32> to vector<2x32xf32>
    %222 = arith.negf %221 : vector<2x32xf32>
    %223 = math.exp %222 : vector<2x32xf32>
    %cst_47 = arith.constant 1.000000e+00 : f32
    %224 = vector.broadcast %cst_47 : f32 to vector<2x32xf32>
    %225 = arith.addf %224, %223 : vector<2x32xf32>
    %226 = arith.divf %224, %225 : vector<2x32xf32>
    %227 = vector.extract_strided_slice %214 {offsets = [0, 64], sizes = [2, 32], strides = [1, 1]} : vector<2x128xf32> to vector<2x32xf32>
    %228 = math.tanh %227 : vector<2x32xf32>
    %229 = vector.extract_strided_slice %214 {offsets = [0, 96], sizes = [2, 32], strides = [1, 1]} : vector<2x128xf32> to vector<2x32xf32>
    %230 = arith.negf %229 : vector<2x32xf32>
    %231 = math.exp %230 : vector<2x32xf32>
    %cst_48 = arith.constant 1.000000e+00 : f32
    %232 = vector.broadcast %cst_48 : f32 to vector<2x32xf32>
    %233 = arith.addf %232, %231 : vector<2x32xf32>
    %234 = arith.divf %232, %233 : vector<2x32xf32>
    %235 = arith.mulf %226, %208 : vector<2x32xf32>
    %236 = arith.mulf %220, %228 : vector<2x32xf32>
    %237 = arith.addf %235, %236 : vector<2x32xf32>
    %238 = math.tanh %237 : vector<2x32xf32>
    %239 = arith.mulf %234, %238 : vector<2x32xf32>
    %c14 = arith.constant 14 : index
    %c0_49 = arith.constant 0 : index
    %240 = vector.load %arg19[%c14, %c0_49] : memref<16x32xf32, #tpu.memory_space<vmem>>, vector<2x32xf32>
    tpu.vector_store %arg19[%c14, %c0_49], %239 {strides = array<i32>} : memref<16x32xf32, #tpu.memory_space<vmem>>, vector<2x32xf32>,
    %c0_50 = arith.constant 0 : index
    %c0_51 = arith.constant 0 : index
    %241 = vector.load %arg4[%c0_50, %c0_51] : memref<32x16xf32, #tpu.memory_space<vmem>>, vector<32x16xf32>
    %cst_52 = arith.constant dense<0.000000e+00> : vector<2x16xf32>
    %242 = tpu.matmul %239, %241, %cst_52 {dimension_numbers = #tpu.dot_dimension_numbers<[1], [0], [0], [1], [0, 0, 1, 1], [], []>} : vector<2x32xf32>, vector<32x16xf32>, vector<2x16xf32> -> vector<2x16xf32>
    %c0_53 = arith.constant 0 : index
    %c0_54 = arith.constant 0 : index
    %243 = vector.load %arg5[%c0_53, %c0_54] : memref<1x16xf32, #tpu.memory_space<vmem>>, vector<1x16xf32>
    %244 = vector.broadcast %243 : vector<1x16xf32> to vector<2x16xf32>
    %245 = arith.addf %242, %244 : vector<2x16xf32>
    %c0_55 = arith.constant 0 : index
    %c0_56 = arith.constant 0 : index
    %246 = vector.load %arg8[%c0_55, %c0_56] : memref<16x16xf32, #tpu.memory_space<vmem>>, vector<16x16xf32>
    %cst_57 = arith.constant dense<0.000000e+00> : vector<2x16xf32>
    %247 = tpu.matmul %245, %246, %cst_57 {dimension_numbers = #tpu.dot_dimension_numbers<[1], [0], [0], [1], [0, 0, 1, 1], [], []>} : vector<2x16xf32>, vector<16x16xf32>, vector<2x16xf32> -> vector<2x16xf32>
    %c0_58 = arith.constant 0 : index
    %c0_59 = arith.constant 0 : index
    %248 = vector.load %arg9[%c0_58, %c0_59] : memref<1x16xf32, #tpu.memory_space<vmem>>, vector<1x16xf32>
    %249 = vector.broadcast %248 : vector<1x16xf32> to vector<2x16xf32>
    %250 = arith.addf %247, %249 : vector<2x16xf32>
    %c0_60 = arith.constant 0 : index
    %c0_61 = arith.constant 0 : index
    %251 = vector.load %arg19[%c0_60, %c0_61] : memref<16x32xf32, #tpu.memory_space<vmem>>, vector<16x32xf32>
    %c0_62 = arith.constant 0 : index
    %c0_63 = arith.constant 0 : index
    %252 = vector.load %arg6[%c0_62, %c0_63] : memref<32x16xf32, #tpu.memory_space<vmem>>, vector<32x16xf32>
    %cst_64 = arith.constant dense<0.000000e+00> : vector<16x16xf32>
    %253 = tpu.matmul %251, %252, %cst_64 {dimension_numbers = #tpu.dot_dimension_numbers<[1], [0], [0], [1], [0, 0, 1, 1], [], []>} : vector<16x32xf32>, vector<32x16xf32>, vector<16x16xf32> -> vector<16x16xf32>
    %c0_65 = arith.constant 0 : index
    %c0_66 = arith.constant 0 : index
    %254 = vector.load %arg7[%c0_65, %c0_66] : memref<1x16xf32, #tpu.memory_space<vmem>>, vector<1x16xf32>
    %255 = vector.broadcast %254 : vector<1x16xf32> to vector<16x16xf32>
    %256 = arith.addf %253, %255 : vector<16x16xf32>
    %c0_67 = arith.constant 0 : index
    %c0_68 = arith.constant 0 : index
    %257 = vector.load %arg15[%c0_67, %c0_68] : memref<16x2xf32, #tpu.memory_space<vmem>>, vector<16x2xf32>
    %cst_69 = arith.constant dense<0.000000e+00> : vector<16x16xf32>
    %258 = tpu.matmul %257, %250, %cst_69 {dimension_numbers = #tpu.dot_dimension_numbers<[1], [0], [0], [1], [0, 0, 1, 1], [], []>} : vector<16x2xf32>, vector<2x16xf32>, vector<16x16xf32> -> vector<16x16xf32>
    %259 = arith.addf %256, %258 : vector<16x16xf32>
    %260 = math.tanh %259 : vector<16x16xf32>
    %c0_70 = arith.constant 0 : index
    %c0_71 = arith.constant 0 : index
    %261 = vector.load %arg10[%c0_70, %c0_71] : memref<1x16xf32, #tpu.memory_space<vmem>>, vector<1x16xf32>
    %262 = vector.broadcast %261 : vector<1x16xf32> to vector<16x16xf32>
    %263 = arith.mulf %260, %262 : vector<16x16xf32>
    %cst_72 = arith.constant dense<0.000000e+00> : vector<16xf32>
    %264 = vector.multi_reduction <add>, %263, %cst_72 [1] : vector<16x16xf32> to vector<16xf32>
    %265 = vector.shape_cast %264 : vector<16xf32> to vector<16x1xf32>
    %c0_73 = arith.constant 0 : index
    %c0_74 = arith.constant 0 : index
    %266 = vector.load %arg11[%c0_73, %c0_74] : memref<1x1xf32, #tpu.memory_space<vmem>>, vector<1x1xf32>
    %267 = vector.broadcast %266 : vector<1x1xf32> to vector<16x1xf32>
    %268 = arith.addf %265, %267 : vector<16x1xf32>
    %c0_75 = arith.constant 0 : index
    %c0_76 = arith.constant 0 : index
    %269 = vector.load %arg17[%c0_75, %c0_76] : memref<2x16xf32, #tpu.memory_space<vmem>>, vector<2x16xf32>
    %c0_77 = arith.constant 0 : index
    %c0_78 = arith.constant 0 : index
    %270 = vector.load %arg16[%c0_77, %c0_78] : memref<16x8xf32, #tpu.memory_space<vmem>>, vector<16x8xf32>
    %271 = vector.broadcast %268 : vector<16x1xf32> to vector<16x8xf32>
    %272 = arith.mulf %271, %270 : vector<16x8xf32>
    %cst_79 = arith.constant dense<0.000000e+00> : vector<2x8xf32>
    %273 = tpu.matmul %269, %272, %cst_79 {dimension_numbers = #tpu.dot_dimension_numbers<[1], [0], [0], [1], [0, 0, 1, 1], [], []>} : vector<2x16xf32>, vector<16x8xf32>, vector<2x8xf32> -> vector<2x8xf32>
    %cst_80 = arith.constant dense<0xFF800000> : vector<2xf32>
    %274 = vector.multi_reduction <maximumf>, %273, %cst_80 [1] : vector<2x8xf32> to vector<2xf32>
    %275 = vector.shape_cast %274 : vector<2xf32> to vector<2x1xf32>
    %276 = vector.broadcast %275 : vector<2x1xf32> to vector<2x8xf32>
    %277 = arith.subf %273, %276 : vector<2x8xf32>
    %278 = math.exp %277 : vector<2x8xf32>
    %cst_81 = arith.constant dense<0.000000e+00> : vector<2xf32>
    %279 = vector.multi_reduction <add>, %278, %cst_81 [1] : vector<2x8xf32> to vector<2xf32>
    %280 = vector.shape_cast %279 : vector<2xf32> to vector<2x1xf32>
    %281 = tpu.reciprocal %280 : vector<2x1xf32> -> vector<2x1xf32>
    %282 = vector.broadcast %281 : vector<2x1xf32> to vector<2x8xf32>
    %283 = arith.mulf %278, %282 : vector<2x8xf32>
    %cst_82 = arith.constant 0.000000e+00 : f32
    %284 = vector.broadcast %cst_82 : f32 to vector<2x32xf32>
    %285 = vector.extract_strided_slice %283 {offsets = [0, 0], sizes = [2, 1], strides = [1, 1]} : vector<2x8xf32> to vector<2x1xf32>
    %c0_83 = arith.constant 0 : index
    %c0_84 = arith.constant 0 : index
    %286 = vector.load %arg19[%c0_83, %c0_84] : memref<16x32xf32, #tpu.memory_space<vmem>>, vector<2x32xf32>
    %287 = vector.broadcast %285 : vector<2x1xf32> to vector<2x32xf32>
    %288 = arith.mulf %287, %286 : vector<2x32xf32>
    %289 = arith.addf %284, %288 : vector<2x32xf32>
    %290 = vector.extract_strided_slice %283 {offsets = [0, 1], sizes = [2, 1], strides = [1, 1]} : vector<2x8xf32> to vector<2x1xf32>
    %c2_85 = arith.constant 2 : index
    %c0_86 = arith.constant 0 : index
    %291 = vector.load %arg19[%c2_85, %c0_86] : memref<16x32xf32, #tpu.memory_space<vmem>>, vector<2x32xf32>
    %292 = vector.broadcast %290 : vector<2x1xf32> to vector<2x32xf32>
    %293 = arith.mulf %292, %291 : vector<2x32xf32>
    %294 = arith.addf %289, %293 : vector<2x32xf32>
    %295 = vector.extract_strided_slice %283 {offsets = [0, 2], sizes = [2, 1], strides = [1, 1]} : vector<2x8xf32> to vector<2x1xf32>
    %c4_87 = arith.constant 4 : index
    %c0_88 = arith.constant 0 : index
    %296 = vector.load %arg19[%c4_87, %c0_88] : memref<16x32xf32, #tpu.memory_space<vmem>>, vector<2x32xf32>
    %297 = vector.broadcast %295 : vector<2x1xf32> to vector<2x32xf32>
    %298 = arith.mulf %297, %296 : vector<2x32xf32>
    %299 = arith.addf %294, %298 : vector<2x32xf32>
    %300 = vector.extract_strided_slice %283 {offsets = [0, 3], sizes = [2, 1], strides = [1, 1]} : vector<2x8xf32> to vector<2x1xf32>
    %c6_89 = arith.constant 6 : index
    %c0_90 = arith.constant 0 : index
    %301 = vector.load %arg19[%c6_89, %c0_90] : memref<16x32xf32, #tpu.memory_space<vmem>>, vector<2x32xf32>
    %302 = vector.broadcast %300 : vector<2x1xf32> to vector<2x32xf32>
    %303 = arith.mulf %302, %301 : vector<2x32xf32>
    %304 = arith.addf %299, %303 : vector<2x32xf32>
    %305 = vector.extract_strided_slice %283 {offsets = [0, 4], sizes = [2, 1], strides = [1, 1]} : vector<2x8xf32> to vector<2x1xf32>
    %c8_91 = arith.constant 8 : index
    %c0_92 = arith.constant 0 : index
    %306 = vector.load %arg19[%c8_91, %c0_92] : memref<16x32xf32, #tpu.memory_space<vmem>>, vector<2x32xf32>
    %307 = vector.broadcast %305 : vector<2x1xf32> to vector<2x32xf32>
    %308 = arith.mulf %307, %306 : vector<2x32xf32>
    %309 = arith.addf %304, %308 : vector<2x32xf32>
    %310 = vector.extract_strided_slice %283 {offsets = [0, 5], sizes = [2, 1], strides = [1, 1]} : vector<2x8xf32> to vector<2x1xf32>
    %c10_93 = arith.constant 10 : index
    %c0_94 = arith.constant 0 : index
    %311 = vector.load %arg19[%c10_93, %c0_94] : memref<16x32xf32, #tpu.memory_space<vmem>>, vector<2x32xf32>
    %312 = vector.broadcast %310 : vector<2x1xf32> to vector<2x32xf32>
    %313 = arith.mulf %312, %311 : vector<2x32xf32>
    %314 = arith.addf %309, %313 : vector<2x32xf32>
    %315 = vector.extract_strided_slice %283 {offsets = [0, 6], sizes = [2, 1], strides = [1, 1]} : vector<2x8xf32> to vector<2x1xf32>
    %c12_95 = arith.constant 12 : index
    %c0_96 = arith.constant 0 : index
    %316 = vector.load %arg19[%c12_95, %c0_96] : memref<16x32xf32, #tpu.memory_space<vmem>>, vector<2x32xf32>
    %317 = vector.broadcast %315 : vector<2x1xf32> to vector<2x32xf32>
    %318 = arith.mulf %317, %316 : vector<2x32xf32>
    %319 = arith.addf %314, %318 : vector<2x32xf32>
    %320 = vector.extract_strided_slice %283 {offsets = [0, 7], sizes = [2, 1], strides = [1, 1]} : vector<2x8xf32> to vector<2x1xf32>
    %c14_97 = arith.constant 14 : index
    %c0_98 = arith.constant 0 : index
    %321 = vector.load %arg19[%c14_97, %c0_98] : memref<16x32xf32, #tpu.memory_space<vmem>>, vector<2x32xf32>
    %322 = vector.broadcast %320 : vector<2x1xf32> to vector<2x32xf32>
    %323 = arith.mulf %322, %321 : vector<2x32xf32>
    %324 = arith.addf %319, %323 : vector<2x32xf32>
    %c0_99 = arith.constant 0 : index
    %c0_100 = arith.constant 0 : index
    %325 = vector.load %arg12[%c0_99, %c0_100] : memref<16x2xf32, #tpu.memory_space<vmem>>, vector<16x2xf32>
    %cst_101 = arith.constant dense<0.000000e+00> : vector<2x2xf32>
    %326 = tpu.matmul %245, %325, %cst_101 {dimension_numbers = #tpu.dot_dimension_numbers<[1], [0], [0], [1], [0, 0, 1, 1], [], []>} : vector<2x16xf32>, vector<16x2xf32>, vector<2x2xf32> -> vector<2x2xf32>
    %c0_102 = arith.constant 0 : index
    %c0_103 = arith.constant 0 : index
    %327 = vector.load %arg13[%c0_102, %c0_103] : memref<32x2xf32, #tpu.memory_space<vmem>>, vector<32x2xf32>
    %cst_104 = arith.constant dense<0.000000e+00> : vector<2x2xf32>
    %328 = tpu.matmul %324, %327, %cst_104 {dimension_numbers = #tpu.dot_dimension_numbers<[1], [0], [0], [1], [0, 0, 1, 1], [], []>} : vector<2x32xf32>, vector<32x2xf32>, vector<2x2xf32> -> vector<2x2xf32>
    %329 = arith.addf %326, %328 : vector<2x2xf32>
    %c0_105 = arith.constant 0 : index
    %c0_106 = arith.constant 0 : index
    %330 = vector.load %arg14[%c0_105, %c0_106] : memref<1x2xf32, #tpu.memory_space<vmem>>, vector<1x2xf32>
    %331 = vector.broadcast %330 : vector<1x2xf32> to vector<2x2xf32>
    %332 = arith.addf %329, %331 : vector<2x2xf32>
    %333 = arith.negf %332 : vector<2x2xf32>
    %334 = math.exp %333 : vector<2x2xf32>
    %cst_107 = arith.constant 1.000000e+00 : f32
    %335 = vector.broadcast %cst_107 : f32 to vector<2x2xf32>
    %336 = arith.addf %335, %334 : vector<2x2xf32>
    %337 = arith.divf %335, %336 : vector<2x2xf32>
    %c0_108 = arith.constant 0 : index
    %c0_109 = arith.constant 0 : index
    %338 = vector.load %arg18[%c0_108, %c0_109] : memref<2x2xf32, #tpu.memory_space<vmem>>, vector<2x2xf32>
    tpu.vector_store %arg18[%c0_108, %c0_109], %337 {strides = array<i32>} : memref<2x2xf32, #tpu.memory_space<vmem>>, vector<2x2xf32>,
    return
  }
}

</mosaic_0001>

<llo_original>
// kernel: tpu_custom_call.1
$region0: #{tpu_custom_call.1}
  #allocation0 [shape = 'u32[]', space=smem, size = 0x4, offset = 0x4, fixed_abs, tag = 'smem constant byte address 0x4 - core index']
  #allocation1 [shape = 'u32[144,128]{1,0:T(1,128)}', space=vmem, size = 0x12000, scoped, tag = 'internal scratch']
  #allocation2 [shape = 'f32[16,32]{1,0:T(8,128)}', space=vmem, size = 0x2000, scoped, tag = 'scratch operand']
  #allocation3 [shape = 'f32[1,1]{1,0:T(1,128)S(1)}', space=vmem, size = 0x200, scoped, tag = 'scoped memory for tpu_custom_call.1']
  %s0 = inlined_call_operand.vmem [shape: f32[16,32], index: 0, kind: input, shape index: {}]
  %s1 = inlined_call_operand.vmem [shape: f32[32,128], index: 1, kind: input, shape index: {}]
  %s2 = inlined_call_operand.vmem [shape: f32[32,128], index: 2, kind: input, shape index: {}]
  %s3 = inlined_call_operand.vmem [shape: f32[1,128], index: 3, kind: input, shape index: {}]
  %s4 = inlined_call_operand.vmem [shape: f32[32,16], index: 4, kind: input, shape index: {}]
  %s5 = inlined_call_operand.vmem [shape: f32[1,16], index: 5, kind: input, shape index: {}]
  %s6 = inlined_call_operand.vmem [shape: f32[32,16], index: 6, kind: input, shape index: {}]
  %s7 = inlined_call_operand.vmem [shape: f32[1,16], index: 7, kind: input, shape index: {}]
  %s8 = inlined_call_operand.vmem [shape: f32[16,16], index: 8, kind: input, shape index: {}]
  %s9 = inlined_call_operand.vmem [shape: f32[1,16], index: 9, kind: input, shape index: {}]
  %s10 = inlined_call_operand.vmem [shape: f32[1,16], index: 10, kind: input, shape index: {}]
  %s11 = inlined_call_operand.<no memory space> [shape: f32[1,1], index: 11, kind: input, shape index: {}]
  %s12 = inlined_call_operand.vmem [shape: f32[16,2], index: 12, kind: input, shape index: {}]
  %s13 = inlined_call_operand.vmem [shape: f32[32,2], index: 13, kind: input, shape index: {}]
  %s14 = inlined_call_operand.vmem [shape: f32[1,2], index: 14, kind: input, shape index: {}]
  %s15 = inlined_call_operand.vmem [shape: f32[16,2], index: 15, kind: input, shape index: {}]
  %s16 = inlined_call_operand.vmem [shape: f32[16,8], index: 16, kind: input, shape index: {}]
  %s17 = inlined_call_operand.vmem [shape: f32[2,16], index: 17, kind: input, shape index: {}]
  %s18 = inlined_call_operand.hbm [shape: f32[2,2], index: 18, kind: output, shape index: {}]
  %s19 = sld [smem:[#allocation0]]
  $region82: #{tpu_custom_call.1} parent=0
    _
  %s21 = ssub.s32 1, %s19
  %s22 = scalar_select 0, %s21, %s19
  %v23 = vstv %s11
  %24 = vst [vmem:[#allocation3] sm:$0x1] %v23
  $region1: #{tpu_custom_call.1} parent=0
    #allocation4 [shape = 'u8[1024]{0}', space=vmem, size = 0x400, scoped, tag = 'output window, operand 0, single buffered']
    #allocation5 [shape = 's32[1]{0}', space=sflag, size = 0x4, scoped, tag = 'scoped memory for tpu_custom_call.1']
    %25 = vsyncpa [#allocation5], 0
    // Predicated region
    $region2: #{tpu_custom_call.1} parent=1 // pred_check
      _
    $region3: #{tpu_custom_call.1} parent=1 // pred_check_branch
      %27 = sbr.rel (0) target = $region5
    $region4: #{tpu_custom_call.1} parent=1 // pred_region
      _
    $region5: #{tpu_custom_call.1} parent=1 // pred_fallthru
      _
    // Predicated region
    $region6: #{tpu_custom_call.1} parent=1 // pred_check
      _
    $region7: #{tpu_custom_call.1} parent=1 // pred_check_branch
      %29 = sbr.rel (0) target = $region9
    $region8: #{tpu_custom_call.1} parent=1 // pred_region
      _
    $region9: #{tpu_custom_call.1} parent=1 // pred_fallthru
      _
    // Predicated region
    $region10: #{tpu_custom_call.1} parent=1 // pred_check
      _
    $region11: #{tpu_custom_call.1} parent=1 // pred_check_branch
      %31 = sbr.rel (0) target = $region13
    $region12: #{tpu_custom_call.1} parent=1 // pred_region
      _
    $region13: #{tpu_custom_call.1} parent=1 // pred_fallthru
      _
    // Predicated region
    $region14: #{tpu_custom_call.1} parent=1 // pred_check
      _
    $region15: #{tpu_custom_call.1} parent=1 // pred_check_branch
      %33 = sbr.rel (0) target = $region17
    $region16: #{tpu_custom_call.1} parent=1 // pred_region
      _
    $region17: #{tpu_custom_call.1} parent=1 // pred_fallthru
      _
    // Predicated region
    $region18: #{tpu_custom_call.1} parent=1 // pred_check
      _
    $region19: #{tpu_custom_call.1} parent=1 // pred_check_branch
      %35 = sbr.rel (0) target = $region21
    $region20: #{tpu_custom_call.1} parent=1 // pred_region
      _
    $region21: #{tpu_custom_call.1} parent=1 // pred_fallthru
      _
    // Predicated region
    $region22: #{tpu_custom_call.1} parent=1 // pred_check
      _
    $region23: #{tpu_custom_call.1} parent=1 // pred_check_branch
      %37 = sbr.rel (0) target = $region25
    $region24: #{tpu_custom_call.1} parent=1 // pred_region
      _
    $region25: #{tpu_custom_call.1} parent=1 // pred_fallthru
      _
    // Predicated region
    $region26: #{tpu_custom_call.1} parent=1 // pred_check
      _
    $region27: #{tpu_custom_call.1} parent=1 // pred_check_branch
      %39 = sbr.rel (0) target = $region29
    $region28: #{tpu_custom_call.1} parent=1 // pred_region
      _
    $region29: #{tpu_custom_call.1} parent=1 // pred_fallthru
      _
    // Predicated region
    $region30: #{tpu_custom_call.1} parent=1 // pred_check
      _
    $region31: #{tpu_custom_call.1} parent=1 // pred_check_branch
      %41 = sbr.rel (0) target = $region33
    $region32: #{tpu_custom_call.1} parent=1 // pred_region
      _
    $region33: #{tpu_custom_call.1} parent=1 // pred_fallthru
      _
    // Predicated region
    $region34: #{tpu_custom_call.1} parent=1 // pred_check
      _
    $region35: #{tpu_custom_call.1} parent=1 // pred_check_branch
      %43 = sbr.rel (0) target = $region37
    $region36: #{tpu_custom_call.1} parent=1 // pred_region
      _
    $region37: #{tpu_custom_call.1} parent=1 // pred_fallthru
      _
    // Predicated region
    $region38: #{tpu_custom_call.1} parent=1 // pred_check
      _
    $region39: #{tpu_custom_call.1} parent=1 // pred_check_branch
      %45 = sbr.rel (0) target = $region41
    $region40: #{tpu_custom_call.1} parent=1 // pred_region
      _
    $region41: #{tpu_custom_call.1} parent=1 // pred_fallthru
      _
    // Predicated region
    $region42: #{tpu_custom_call.1} parent=1 // pred_check
      _
    $region43: #{tpu_custom_call.1} parent=1 // pred_check_branch
      %47 = sbr.rel (0) target = $region45
    $region44: #{tpu_custom_call.1} parent=1 // pred_region
      _
    $region45: #{tpu_custom_call.1} parent=1 // pred_fallthru
      _
    // Predicated region
    $region46: #{tpu_custom_call.1} parent=1 // pred_check
      _
    $region47: #{tpu_custom_call.1} parent=1 // pred_check_branch
      %49 = sbr.rel (0) target = $region49
    $region48: #{tpu_custom_call.1} parent=1 // pred_region
      _
    $region49: #{tpu_custom_call.1} parent=1 // pred_fallthru
      _
    // Predicated region
    $region50: #{tpu_custom_call.1} parent=1 // pred_check
      _
    $region51: #{tpu_custom_call.1} parent=1 // pred_check_branch
      %51 = sbr.rel (0) target = $region53
    $region52: #{tpu_custom_call.1} parent=1 // pred_region
      _
    $region53: #{tpu_custom_call.1} parent=1 // pred_fallthru
      _
    // Predicated region
    $region54: #{tpu_custom_call.1} parent=1 // pred_check
      _
    $region55: #{tpu_custom_call.1} parent=1 // pred_check_branch
      %53 = sbr.rel (0) target = $region57
    $region56: #{tpu_custom_call.1} parent=1 // pred_region
      _
    $region57: #{tpu_custom_call.1} parent=1 // pred_fallthru
      _
    // Predicated region
    $region58: #{tpu_custom_call.1} parent=1 // pred_check
      _
    $region59: #{tpu_custom_call.1} parent=1 // pred_check_branch
      %55 = sbr.rel (0) target = $region61
    $region60: #{tpu_custom_call.1} parent=1 // pred_region
      _
    $region61: #{tpu_custom_call.1} parent=1 // pred_fallthru
      _
    // Predicated region
    $region62: #{tpu_custom_call.1} parent=1 // pred_check
      _
    $region63: #{tpu_custom_call.1} parent=1 // pred_check_branch
      %57 = sbr.rel (0) target = $region65
    $region64: #{tpu_custom_call.1} parent=1 // pred_region
      _
    $region65: #{tpu_custom_call.1} parent=1 // pred_fallthru
      _
    // Predicated region
    $region66: #{tpu_custom_call.1} parent=1 // pred_check
      _
    $region67: #{tpu_custom_call.1} parent=1 // pred_check_branch
      %59 = sbr.rel (0) target = $region69
    $region68: #{tpu_custom_call.1} parent=1 // pred_region
      _
    $region69: #{tpu_custom_call.1} parent=1 // pred_fallthru
      _
    // Predicated region
    $region70: #{tpu_custom_call.1} parent=1 // pred_check
      _
    $region71: #{tpu_custom_call.1} parent=1 // pred_check_branch
      %61 = sbr.rel (0) target = $region73
    $region72: #{tpu_custom_call.1} parent=1 // pred_region
      _
    $region73: #{tpu_custom_call.1} parent=1 // pred_fallthru
      _
    %v62 = vld [vmem:[%s0] sm:$0xff]
    %v63 = vld [vmem:[%s0 + $0x8] sm:$0xff]
    %v64 = vld [vmem:[%s1] sm:$0xff]
    %v65 = vld [vmem:[%s1 + $0x8] sm:$0xff]
    %v66 = vld [vmem:[%s1 + $0x10] sm:$0xff]
    %v67 = vld [vmem:[%s1 + $0x18] sm:$0xff]
    %v68 = vld [vmem:[%s3] sm:$0x1]
    %v70 = vlaneseq
    %v71 = vshrl.u32 %v70, 7
    %v72 = vsub.s32 0, %v71
    %v73 = vrot.slane %v68, %v72
    %vm75 = vcmask 261120
    %v77 = vsel %vm75, %v62, 0
    %v80 = vsel %vm75, %v63, 0
    %82 = vmatprep.subr.mxu0 0.0
    %83 = vmatpush1.msra.mxu0 %v64
    %84 = vmatprep.subr.mxu0 0.0
    %85 = vmatpush1.msra.mxu0 %v65
    %86 = vmatprep.subr.mxu0 0.0
    %87 = vmatpush1.msra.mxu0 %v66
    %88 = vmatprep.subr.mxu0 0.0
    %89 = vmatpush1.msra.mxu0 %v67
    %90 = vmatprep.subr.mxu0 0.0
    %91 = vmatpush1.msra.mxu0 0.0
    %92 = vmatprep.subr.mxu0 0.0
    %93 = vmatpush1.msra.mxu0 0.0
    %94 = vmatprep.subr.mxu0 0.0
    %95 = vmatpush1.msra.mxu0 0.0
    %96 = vmatprep.subr.mxu0 0.0
    %97 = vmatpush1.msra.mxu0 0.0
    %98 = vmatprep.subr.mxu0 0.0
    %99 = vmatpush1.msra.mxu0 0.0
    %100 = vmatprep.subr.mxu0 0.0
    %101 = vmatpush1.msra.mxu0 0.0
    %102 = vmatprep.subr.mxu0 0.0
    %103 = vmatpush1.msra.mxu0 0.0
    %104 = vmatprep.subr.mxu0 0.0
    %105 = vmatpush1.msra.mxu0 0.0
    %106 = vmatprep.subr.mxu0 0.0
    %107 = vmatpush1.msra.mxu0 0.0
    %108 = vmatprep.subr.mxu0 0.0
    %109 = vmatpush1.msra.mxu0 0.0
    %110 = vmatprep.subr.mxu0 0.0
    %111 = vmatpush1.msra.mxu0 0.0
    %112 = vmatprep.subr.mxu0 0.0
    %113 = vmatpush1.msra.mxu0 0.0
    %114 = vmatprep.subr.mxu0 0.0
    %115 = vmatpush1.msra.mxu0 0.0
    %116 = vmatprep.subr.mxu0 0.0
    %117 = vmatpush1.msra.mxu0 0.0
    %118 = vmatprep.subr.mxu0 0.0
    %119 = vmatpush1.msra.mxu0 0.0
    %120 = vmatprep.subr.mxu0 0.0
    %121 = vmatpush1.msra.mxu0 0.0
    %122 = vmatprep.subr.mxu0 0.0
    %123 = vmatpush1.msra.mxu0 0.0
    %124 = vmatprep.subr.mxu0 0.0
    %125 = vmatpush1.msra.mxu0 0.0
    %126 = vmatprep.subr.mxu0 0.0
    %127 = vmatpush1.msra.mxu0 0.0
    %128 = vmatprep.subr.mxu0 0.0
    %129 = vmatpush1.msra.mxu0 0.0
    %130 = vmatprep.subr.mxu0 0.0
    %131 = vmatpush1.msra.mxu0 0.0
    %132 = vmatprep.subr.mxu0 0.0
    %133 = vmatpush1.msra.mxu0 0.0
    %134 = vmatprep.subr.mxu0 0.0
    %135 = vmatpush1.msra.mxu0 0.0
    %136 = vmatprep.subr.mxu0 0.0
    %137 = vmatpush1.msra.mxu0 0.0
    %138 = vmatprep.subr.mxu0 0.0
    %139 = vmatpush1.msra.mxu0 0.0
    %140 = vmatprep.subr.mxu0 0.0
    %141 = vmatpush1.msra.mxu0 0.0
    %142 = vmatprep.subr.mxu0 0.0
    %143 = vmatpush1.msra.mxu0 0.0
    %144 = vmatprep.subr.mxu0 0.0
    %145 = vmatpush1.msra.mxu0 0.0
    %146 = vmatprep.mubr.f32.mxu0 0.0
    %147 = vmatmul.mubr.f32.gmra.mrb[0].mxu0 %v77
    %v148 = vpop.f32.mrb[0].mxu0
    %v149 = vadd.f32 %v73, %v148
    %v150 = vpop.f32.mrb[0].mxu0
    %151 = vmatprep.mubr.f32.mxu0 0.0
    %152 = vmatmul.mubr.f32.gmra.mrb[0].mxu0 %v80
    %v153 = vpop.f32.mrb[0].mxu0
    %v154 = vadd.f32 %v73, %v153
    %v155 = vpop.f32.mrb[0].mxu0
    %156 = vdwg.mxu0
    %v157 = vld [vmem:[%s2] sm:$0xff]
    %v158 = vld [vmem:[%s2 + $0x8] sm:$0xff]
    %v159 = vld [vmem:[%s2 + $0x10] sm:$0xff]
    %v160 = vld [vmem:[%s2 + $0x18] sm:$0xff]
    %v162 = vsel %vm75, 0.0, 0
    %164 = vmatprep.subr.mxu0 0.0
    %165 = vmatpush1.msra.mxu0 %v157
    %166 = vmatprep.subr.mxu0 0.0
    %167 = vmatpush1.msra.mxu0 %v158
    %168 = vmatprep.subr.mxu0 0.0
    %169 = vmatpush1.msra.mxu0 %v159
    %170 = vmatprep.subr.mxu0 0.0
    %171 = vmatpush1.msra.mxu0 %v160
    %172 = vmatprep.subr.mxu0 0.0
    %173 = vmatpush1.msra.mxu0 0.0
    %174 = vmatprep.subr.mxu0 0.0
    %175 = vmatpush1.msra.mxu0 0.0
    %176 = vmatprep.subr.mxu0 0.0
    %177 = vmatpush1.msra.mxu0 0.0
    %178 = vmatprep.subr.mxu0 0.0
    %179 = vmatpush1.msra.mxu0 0.0
    %180 = vmatprep.subr.mxu0 0.0
    %181 = vmatpush1.msra.mxu0 0.0
    %182 = vmatprep.subr.mxu0 0.0
    %183 = vmatpush1.msra.mxu0 0.0
    %184 = vmatprep.subr.mxu0 0.0
    %185 = vmatpush1.msra.mxu0 0.0
    %186 = vmatprep.subr.mxu0 0.0
    %187 = vmatpush1.msra.mxu0 0.0
    %188 = vmatprep.subr.mxu0 0.0
    %189 = vmatpush1.msra.mxu0 0.0
    %190 = vmatprep.subr.mxu0 0.0
    %191 = vmatpush1.msra.mxu0 0.0
    %192 = vmatprep.subr.mxu0 0.0
    %193 = vmatpush1.msra.mxu0 0.0
    %194 = vmatprep.subr.mxu0 0.0
    %195 = vmatpush1.msra.mxu0 0.0
    %196 = vmatprep.subr.mxu0 0.0
    %197 = vmatpush1.msra.mxu0 0.0
    %198 = vmatprep.subr.mxu0 0.0
    %199 = vmatpush1.msra.mxu0 0.0
    %200 = vmatprep.subr.mxu0 0.0
    %201 = vmatpush1.msra.mxu0 0.0
    %202 = vmatprep.subr.mxu0 0.0
    %203 = vmatpush1.msra.mxu0 0.0
    %204 = vmatprep.subr.mxu0 0.0
    %205 = vmatpush1.msra.mxu0 0.0
    %206 = vmatprep.subr.mxu0 0.0
    %207 = vmatpush1.msra.mxu0 0.0
    %208 = vmatprep.subr.mxu0 0.0
    %209 = vmatpush1.msra.mxu0 0.0
    %210 = vmatprep.subr.mxu0 0.0
    %211 = vmatpush1.msra.mxu0 0.0
    %212 = vmatprep.subr.mxu0 0.0
    %213 = vmatpush1.msra.mxu0 0.0
    %214 = vmatprep.subr.mxu0 0.0
    %215 = vmatpush1.msra.mxu0 0.0
    %216 = vmatprep.subr.mxu0 0.0
    %217 = vmatpush1.msra.mxu0 0.0
    %218 = vmatprep.subr.mxu0 0.0
    %219 = vmatpush1.msra.mxu0 0.0
    %220 = vmatprep.subr.mxu0 0.0
    %221 = vmatpush1.msra.mxu0 0.0
    %222 = vmatprep.subr.mxu0 0.0
    %223 = vmatpush1.msra.mxu0 0.0
    %224 = vmatprep.subr.mxu0 0.0
    %225 = vmatpush1.msra.mxu0 0.0
    %226 = vmatprep.subr.mxu0 0.0
    %227 = vmatpush1.msra.mxu0 0.0
    %228 = vmatprep.mubr.f32.mxu0 0.0
    %229 = vmatmul.mubr.f32.gmra.mrb[0].mxu0 %v162
    %v230 = vpop.f32.mrb[0].mxu0
    %v231 = vadd.f32 0.0, %v230
    %v232 = vpop.f32.mrb[0].mxu0
    %233 = vdwg.mxu0
    %v234 = vadd.f32 %v149, %v231
    %v235 = vxor.u32 %v234, 2147483648
    %v236 = vmul.f32 %v235, 1.442695
    %v237 = vpow.pop %v236
    %v238 = vadd.f32 %v237, 1.0
    %v239 = vrcp.pop %v238
    %v240 = vmul.f32 1.0, %v239
    %v241 = vtanh.pop %v234
    %v242 = vmul.f32 %v240, 0.0
    %244 = vrot.lane.b32.xlu0 %v241, 64
    %v245 = vpop.permute.xlu0 %244
    %v247 = vmul.f32 %v240, %v245
    %249 = vrot.lane.b32.xlu0 %v247, 32
    %v250 = vpop.permute.xlu0 %249
    %v252 = vadd.f32 %v242, %v250
    %v253 = vtanh.pop %v252
    %255 = vrot.lane.b32.xlu0 %v253, 64
    %v256 = vpop.permute.xlu0 %255
    %v258 = vmul.f32 %v240, %v256
    %260 = vrot.lane.b32.xlu0 %v258, 32
    %v261 = vpop.permute.xlu0 %260
    %vm263 = vcmask 254976
    %264 = vst.msk [vmem:[#allocation2] sm:$0x3] %vm263, %v261
    %v265 = vsel %vm75, %v261, 0
    %267 = vmatprep.subr.mxu0 0.0
    %268 = vmatpush1.msra.mxu0 %v157
    %269 = vmatprep.subr.mxu0 0.0
    %270 = vmatpush1.msra.mxu0 %v158
    %271 = vmatprep.subr.mxu0 0.0
    %272 = vmatpush1.msra.mxu0 %v159
    %273 = vmatprep.subr.mxu0 0.0
    %274 = vmatpush1.msra.mxu0 %v160
    %275 = vmatprep.subr.mxu0 0.0
    %276 = vmatpush1.msra.mxu0 0.0
    %277 = vmatprep.subr.mxu0 0.0
    %278 = vmatpush1.msra.mxu0 0.0
    %279 = vmatprep.subr.mxu0 0.0
    %280 = vmatpush1.msra.mxu0 0.0
    %281 = vmatprep.subr.mxu0 0.0
    %282 = vmatpush1.msra.mxu0 0.0
    %283 = vmatprep.subr.mxu0 0.0
    %284 = vmatpush1.msra.mxu0 0.0
    %285 = vmatprep.subr.mxu0 0.0
    %286 = vmatpush1.msra.mxu0 0.0
    %287 = vmatprep.subr.mxu0 0.0
    %288 = vmatpush1.msra.mxu0 0.0
    %289 = vmatprep.subr.mxu0 0.0
    %290 = vmatpush1.msra.mxu0 0.0
    %291 = vmatprep.subr.mxu0 0.0
    %292 = vmatpush1.msra.mxu0 0.0
    %293 = vmatprep.subr.mxu0 0.0
    %294 = vmatpush1.msra.mxu0 0.0
    %295 = vmatprep.subr.mxu0 0.0
    %296 = vmatpush1.msra.mxu0 0.0
    %297 = vmatprep.subr.mxu0 0.0
    %298 = vmatpush1.msra.mxu0 0.0
    %299 = vmatprep.subr.mxu0 0.0
    %300 = vmatpush1.msra.mxu0 0.0
    %301 = vmatprep.subr.mxu0 0.0
    %302 = vmatpush1.msra.mxu0 0.0
    %303 = vmatprep.subr.mxu0 0.0
    %304 = vmatpush1.msra.mxu0 0.0
    %305 = vmatprep.subr.mxu0 0.0
    %306 = vmatpush1.msra.mxu0 0.0
    %307 = vmatprep.subr.mxu0 0.0
    %308 = vmatpush1.msra.mxu0 0.0
    %309 = vmatprep.subr.mxu0 0.0
    %310 = vmatpush1.msra.mxu0 0.0
    %311 = vmatprep.subr.mxu0 0.0
    %312 = vmatpush1.msra.mxu0 0.0
    %313 = vmatprep.subr.mxu0 0.0
    %314 = vmatpush1.msra.mxu0 0.0
    %315 = vmatprep.subr.mxu0 0.0
    %316 = vmatpush1.msra.mxu0 0.0
    %317 = vmatprep.subr.mxu0 0.0
    %318 = vmatpush1.msra.mxu0 0.0
    %319 = vmatprep.subr.mxu0 0.0
    %320 = vmatpush1.msra.mxu0 0.0
    %321 = vmatprep.subr.mxu0 0.0
    %322 = vmatpush1.msra.mxu0 0.0
    %323 = vmatprep.subr.mxu0 0.0
    %324 = vmatpush1.msra.mxu0 0.0
    %325 = vmatprep.subr.mxu0 0.0
    %326 = vmatpush1.msra.mxu0 0.0
    %327 = vmatprep.subr.mxu0 0.0
    %328 = vmatpush1.msra.mxu0 0.0
    %329 = vmatprep.subr.mxu0 0.0
    %330 = vmatpush1.msra.mxu0 0.0
    %331 = vmatprep.mubr.f32.mxu0 0.0
    %332 = vmatmul.mubr.f32.gmra.mrb[0].mxu0 %v265
    %v333 = vpop.f32.mrb[0].mxu0
    %v334 = vadd.f32 0.0, %v333
    %v335 = vpop.f32.mrb[0].mxu0
    %336 = vdwg.mxu0
    %v338 = vrot.slane %v334, 6
    %v340 = vadd.f32 %v149, %v338
    %v341 = vxor.u32 %v340, 2147483648
    %v342 = vmul.f32 %v341, 1.442695
    %v343 = vpow.pop %v342
    %v344 = vadd.f32 %v343, 1.0
    %v345 = vrcp.pop %v344
    %v346 = vmul.f32 1.0, %v345
    %v347 = vtanh.pop %v340
    %v349 = vrot.slane %v252, 6
    %v351 = vmul.f32 %v346, %v349
    %353 = vrot.lane.b32.xlu0 %v347, 64
    %v354 = vpop.permute.xlu0 %353
    %v356 = vmul.f32 %v346, %v354
    %358 = vrot.lane.b32.xlu0 %v356, 32
    %v359 = vpop.permute.xlu0 %358
    %v361 = vadd.f32 %v351, %v359
    %v362 = vtanh.pop %v361
    %364 = vrot.lane.b32.xlu0 %v362, 64
    %v365 = vpop.permute.xlu0 %364
    %v367 = vmul.f32 %v346, %v365
    %369 = vrot.lane.b32.xlu0 %v367, 32
    %v370 = vpop.permute.xlu0 %369
    %vm372 = vcmask 257026
    %373 = vst.msk [vmem:[#allocation2] sm:$0xc] %vm372, %v370
    %v374 = vrot.slane %v367, 2
    %375 = vrot.lane.b32.xlu0 %v374, 32
    %v376 = vpop.permute.xlu0 %375
    %v377 = vsel %vm75, %v376, 0
    %379 = vmatprep.subr.mxu0 0.0
    %380 = vmatpush1.msra.mxu0 %v157
    %381 = vmatprep.subr.mxu0 0.0
    %382 = vmatpush1.msra.mxu0 %v158
    %383 = vmatprep.subr.mxu0 0.0
    %384 = vmatpush1.msra.mxu0 %v159
    %385 = vmatprep.subr.mxu0 0.0
    %386 = vmatpush1.msra.mxu0 %v160
    %387 = vmatprep.subr.mxu0 0.0
    %388 = vmatpush1.msra.mxu0 0.0
    %389 = vmatprep.subr.mxu0 0.0
    %390 = vmatpush1.msra.mxu0 0.0
    %391 = vmatprep.subr.mxu0 0.0
    %392 = vmatpush1.msra.mxu0 0.0
    %393 = vmatprep.subr.mxu0 0.0
    %394 = vmatpush1.msra.mxu0 0.0
    %395 = vmatprep.subr.mxu0 0.0
    %396 = vmatpush1.msra.mxu0 0.0
    %397 = vmatprep.subr.mxu0 0.0
    %398 = vmatpush1.msra.mxu0 0.0
    %399 = vmatprep.subr.mxu0 0.0
    %400 = vmatpush1.msra.mxu0 0.0
    %401 = vmatprep.subr.mxu0 0.0
    %402 = vmatpush1.msra.mxu0 0.0
    %403 = vmatprep.subr.mxu0 0.0
    %404 = vmatpush1.msra.mxu0 0.0
    %405 = vmatprep.subr.mxu0 0.0
    %406 = vmatpush1.msra.mxu0 0.0
    %407 = vmatprep.subr.mxu0 0.0
    %408 = vmatpush1.msra.mxu0 0.0
    %409 = vmatprep.subr.mxu0 0.0
    %410 = vmatpush1.msra.mxu0 0.0
    %411 = vmatprep.subr.mxu0 0.0
    %412 = vmatpush1.msra.mxu0 0.0
    %413 = vmatprep.subr.mxu0 0.0
    %414 = vmatpush1.msra.mxu0 0.0
    %415 = vmatprep.subr.mxu0 0.0
    %416 = vmatpush1.msra.mxu0 0.0
    %417 = vmatprep.subr.mxu0 0.0
    %418 = vmatpush1.msra.mxu0 0.0
    %419 = vmatprep.subr.mxu0 0.0
    %420 = vmatpush1.msra.mxu0 0.0
    %421 = vmatprep.subr.mxu0 0.0
    %422 = vmatpush1.msra.mxu0 0.0
    %423 = vmatprep.subr.mxu0 0.0
    %424 = vmatpush1.msra.mxu0 0.0
    %425 = vmatprep.subr.mxu0 0.0
    %426 = vmatpush1.msra.mxu0 0.0
    %427 = vmatprep.subr.mxu0 0.0
    %428 = vmatpush1.msra.mxu0 0.0
    %429 = vmatprep.subr.mxu0 0.0
    %430 = vmatpush1.msra.mxu0 0.0
    %431 = vmatprep.subr.mxu0 0.0
    %432 = vmatpush1.msra.mxu0 0.0
    %433 = vmatprep.subr.mxu0 0.0
    %434 = vmatpush1.msra.mxu0 0.0
    %435 = vmatprep.subr.mxu0 0.0
    %436 = vmatpush1.msra.mxu0 0.0
    %437 = vmatprep.subr.mxu0 0.0
    %438 = vmatpush1.msra.mxu0 0.0
    %439 = vmatprep.subr.mxu0 0.0
    %440 = vmatpush1.msra.mxu0 0.0
    %441 = vmatprep.subr.mxu0 0.0
    %442 = vmatpush1.msra.mxu0 0.0
    %443 = vmatprep.mubr.f32.mxu0 0.0
    %444 = vmatmul.mubr.f32.gmra.mrb[0].mxu0 %v377
    %v445 = vpop.f32.mrb[0].mxu0
    %v446 = vadd.f32 0.0, %v445
    %v447 = vpop.f32.mrb[0].mxu0
    %448 = vdwg.mxu0
    %v450 = vrot.slane %v446, 4
    %v452 = vadd.f32 %v149, %v450
    %v453 = vxor.u32 %v452, 2147483648
    %v454 = vmul.f32 %v453, 1.442695
    %v455 = vpow.pop %v454
    %v456 = vadd.f32 %v455, 1.0
    %v457 = vrcp.pop %v456
    %v458 = vmul.f32 1.0, %v457
    %v459 = vtanh.pop %v452
    %v461 = vrot.slane %v361, 6
    %v463 = vmul.f32 %v458, %v461
    %465 = vrot.lane.b32.xlu0 %v459, 64
    %v466 = vpop.permute.xlu0 %465
    %v468 = vmul.f32 %v458, %v466
    %470 = vrot.lane.b32.xlu0 %v468, 32
    %v471 = vpop.permute.xlu0 %470
    %v473 = vadd.f32 %v463, %v471
    %v474 = vtanh.pop %v473
    %476 = vrot.lane.b32.xlu0 %v474, 64
    %v477 = vpop.permute.xlu0 %476
    %v479 = vmul.f32 %v458, %v477
    %481 = vrot.lane.b32.xlu0 %v479, 32
    %v482 = vpop.permute.xlu0 %481
    %vm484 = vcmask 259076
    %485 = vst.msk [vmem:[#allocation2] sm:$0x30] %vm484, %v482
    %v486 = vrot.slane %v479, 4
    %487 = vrot.lane.b32.xlu0 %v486, 32
    %v488 = vpop.permute.xlu0 %487
    %v489 = vsel %vm75, %v488, 0
    %491 = vmatprep.subr.mxu0 0.0
    %492 = vmatpush1.msra.mxu0 %v157
    %493 = vmatprep.subr.mxu0 0.0
    %494 = vmatpush1.msra.mxu0 %v158
    %495 = vmatprep.subr.mxu0 0.0
    %496 = vmatpush1.msra.mxu0 %v159
    %497 = vmatprep.subr.mxu0 0.0
    %498 = vmatpush1.msra.mxu0 %v160
    %499 = vmatprep.subr.mxu0 0.0
    %500 = vmatpush1.msra.mxu0 0.0
    %501 = vmatprep.subr.mxu0 0.0
    %502 = vmatpush1.msra.mxu0 0.0
    %503 = vmatprep.subr.mxu0 0.0
    %504 = vmatpush1.msra.mxu0 0.0
    %505 = vmatprep.subr.mxu0 0.0
    %506 = vmatpush1.msra.mxu0 0.0
    %507 = vmatprep.subr.mxu0 0.0
    %508 = vmatpush1.msra.mxu0 0.0
    %509 = vmatprep.subr.mxu0 0.0
    %510 = vmatpush1.msra.mxu0 0.0
    %511 = vmatprep.subr.mxu0 0.0
    %512 = vmatpush1.msra.mxu0 0.0
    %513 = vmatprep.subr.mxu0 0.0
    %514 = vmatpush1.msra.mxu0 0.0
    %515 = vmatprep.subr.mxu0 0.0
    %516 = vmatpush1.msra.mxu0 0.0
    %517 = vmatprep.subr.mxu0 0.0
    %518 = vmatpush1.msra.mxu0 0.0
    %519 = vmatprep.subr.mxu0 0.0
    %520 = vmatpush1.msra.mxu0 0.0
    %521 = vmatprep.subr.mxu0 0.0
    %522 = vmatpush1.msra.mxu0 0.0
    %523 = vmatprep.subr.mxu0 0.0
    %524 = vmatpush1.msra.mxu0 0.0
    %525 = vmatprep.subr.mxu0 0.0
    %526 = vmatpush1.msra.mxu0 0.0
    %527 = vmatprep.subr.mxu0 0.0
    %528 = vmatpush1.msra.mxu0 0.0
    %529 = vmatprep.subr.mxu0 0.0
    %530 = vmatpush1.msra.mxu0 0.0
    %531 = vmatprep.subr.mxu0 0.0
    %532 = vmatpush1.msra.mxu0 0.0
    %533 = vmatprep.subr.mxu0 0.0
    %534 = vmatpush1.msra.mxu0 0.0
    %535 = vmatprep.subr.mxu0 0.0
    %536 = vmatpush1.msra.mxu0 0.0
    %537 = vmatprep.subr.mxu0 0.0
    %538 = vmatpush1.msra.mxu0 0.0
    %539 = vmatprep.subr.mxu0 0.0
    %540 = vmatpush1.msra.mxu0 0.0
    %541 = vmatprep.subr.mxu0 0.0
    %542 = vmatpush1.msra.mxu0 0.0
    %543 = vmatprep.subr.mxu0 0.0
    %544 = vmatpush1.msra.mxu0 0.0
    %545 = vmatprep.subr.mxu0 0.0
    %546 = vmatpush1.msra.mxu0 0.0
    %547 = vmatprep.subr.mxu0 0.0
    %548 = vmatpush1.msra.mxu0 0.0
    %549 = vmatprep.subr.mxu0 0.0
    %550 = vmatpush1.msra.mxu0 0.0
    %551 = vmatprep.subr.mxu0 0.0
    %552 = vmatpush1.msra.mxu0 0.0
    %553 = vmatprep.subr.mxu0 0.0
    %554 = vmatpush1.msra.mxu0 0.0
    %555 = vmatprep.mubr.f32.mxu0 0.0
    %556 = vmatmul.mubr.f32.gmra.mrb[0].mxu0 %v489
    %v557 = vpop.f32.mrb[0].mxu0
    %v558 = vadd.f32 0.0, %v557
    %v559 = vpop.f32.mrb[0].mxu0
    %560 = vdwg.mxu0
    %v562 = vrot.slane %v558, 2
    %v564 = vadd.f32 %v149, %v562
    %v565 = vxor.u32 %v564, 2147483648
    %v566 = vmul.f32 %v565, 1.442695
    %v567 = vpow.pop %v566
    %v568 = vadd.f32 %v567, 1.0
    %v569 = vrcp.pop %v568
    %v570 = vmul.f32 1.0, %v569
    %v571 = vtanh.pop %v564
    %v573 = vrot.slane %v473, 6
    %v575 = vmul.f32 %v570, %v573
    %577 = vrot.lane.b32.xlu0 %v571, 64
    %v578 = vpop.permute.xlu0 %577
    %v580 = vmul.f32 %v570, %v578
    %582 = vrot.lane.b32.xlu0 %v580, 32
    %v583 = vpop.permute.xlu0 %582
    %v585 = vadd.f32 %v575, %v583
    %v586 = vtanh.pop %v585
    %588 = vrot.lane.b32.xlu0 %v586, 64
    %v589 = vpop.permute.xlu0 %588
    %v591 = vmul.f32 %v570, %v589
    %593 = vrot.lane.b32.xlu0 %v591, 32
    %v594 = vpop.permute.xlu0 %593
    %vm596 = vcmask 261126
    %597 = vst.msk [vmem:[#allocation2] sm:$0xc0] %vm596, %v594
    %v598 = vrot.slane %v591, 6
    %599 = vrot.lane.b32.xlu0 %v598, 32
    %v600 = vpop.permute.xlu0 %599
    %v601 = vsel %vm75, %v600, 0
    %603 = vmatprep.subr.mxu0 0.0
    %604 = vmatpush1.msra.mxu0 %v157
    %605 = vmatprep.subr.mxu0 0.0
    %606 = vmatpush1.msra.mxu0 %v158
    %607 = vmatprep.subr.mxu0 0.0
    %608 = vmatpush1.msra.mxu0 %v159
    %609 = vmatprep.subr.mxu0 0.0
    %610 = vmatpush1.msra.mxu0 %v160
    %611 = vmatprep.subr.mxu0 0.0
    %612 = vmatpush1.msra.mxu0 0.0
    %613 = vmatprep.subr.mxu0 0.0
    %614 = vmatpush1.msra.mxu0 0.0
    %615 = vmatprep.subr.mxu0 0.0
    %616 = vmatpush1.msra.mxu0 0.0
    %617 = vmatprep.subr.mxu0 0.0
    %618 = vmatpush1.msra.mxu0 0.0
    %619 = vmatprep.subr.mxu0 0.0
    %620 = vmatpush1.msra.mxu0 0.0
    %621 = vmatprep.subr.mxu0 0.0
    %622 = vmatpush1.msra.mxu0 0.0
    %623 = vmatprep.subr.mxu0 0.0
    %624 = vmatpush1.msra.mxu0 0.0
    %625 = vmatprep.subr.mxu0 0.0
    %626 = vmatpush1.msra.mxu0 0.0
    %627 = vmatprep.subr.mxu0 0.0
    %628 = vmatpush1.msra.mxu0 0.0
    %629 = vmatprep.subr.mxu0 0.0
    %630 = vmatpush1.msra.mxu0 0.0
    %631 = vmatprep.subr.mxu0 0.0
    %632 = vmatpush1.msra.mxu0 0.0
    %633 = vmatprep.subr.mxu0 0.0
    %634 = vmatpush1.msra.mxu0 0.0
    %635 = vmatprep.subr.mxu0 0.0
    %636 = vmatpush1.msra.mxu0 0.0
    %637 = vmatprep.subr.mxu0 0.0
    %638 = vmatpush1.msra.mxu0 0.0
    %639 = vmatprep.subr.mxu0 0.0
    %640 = vmatpush1.msra.mxu0 0.0
    %641 = vmatprep.subr.mxu0 0.0
    %642 = vmatpush1.msra.mxu0 0.0
    %643 = vmatprep.subr.mxu0 0.0
    %644 = vmatpush1.msra.mxu0 0.0
    %645 = vmatprep.subr.mxu0 0.0
    %646 = vmatpush1.msra.mxu0 0.0
    %647 = vmatprep.subr.mxu0 0.0
    %648 = vmatpush1.msra.mxu0 0.0
    %649 = vmatprep.subr.mxu0 0.0
    %650 = vmatpush1.msra.mxu0 0.0
    %651 = vmatprep.subr.mxu0 0.0
    %652 = vmatpush1.msra.mxu0 0.0
    %653 = vmatprep.subr.mxu0 0.0
    %654 = vmatpush1.msra.mxu0 0.0
    %655 = vmatprep.subr.mxu0 0.0
    %656 = vmatpush1.msra.mxu0 0.0
    %657 = vmatprep.subr.mxu0 0.0
    %658 = vmatpush1.msra.mxu0 0.0
    %659 = vmatprep.subr.mxu0 0.0
    %660 = vmatpush1.msra.mxu0 0.0
    %661 = vmatprep.subr.mxu0 0.0
    %662 = vmatpush1.msra.mxu0 0.0
    %663 = vmatprep.subr.mxu0 0.0
    %664 = vmatpush1.msra.mxu0 0.0
    %665 = vmatprep.subr.mxu0 0.0
    %666 = vmatpush1.msra.mxu0 0.0
    %667 = vmatprep.mubr.f32.mxu0 0.0
    %668 = vmatmul.mubr.f32.gmra.mrb[0].mxu0 %v601
    %v669 = vpop.f32.mrb[0].mxu0
    %v670 = vadd.f32 0.0, %v669
    %v671 = vpop.f32.mrb[0].mxu0
    %672 = vdwg.mxu0
    %v673 = vadd.f32 %v154, %v670
    %v674 = vxor.u32 %v673, 2147483648
    %v675 = vmul.f32 %v674, 1.442695
    %v676 = vpow.pop %v675
    %v677 = vadd.f32 %v676, 1.0
    %v678 = vrcp.pop %v677
    %v679 = vmul.f32 1.0, %v678
    %v680 = vtanh.pop %v673
    %v682 = vrot.slane %v585, 6
    %v684 = vmul.f32 %v679, %v682
    %686 = vrot.lane.b32.xlu0 %v680, 64
    %v687 = vpop.permute.xlu0 %686
    %v689 = vmul.f32 %v679, %v687
    %691 = vrot.lane.b32.xlu0 %v689, 32
    %v692 = vpop.permute.xlu0 %691
    %v694 = vadd.f32 %v684, %v692
    %v695 = vtanh.pop %v694
    %697 = vrot.lane.b32.xlu0 %v695, 64
    %v698 = vpop.permute.xlu0 %697
    %v700 = vmul.f32 %v679, %v698
    %702 = vrot.lane.b32.xlu0 %v700, 32
    %v703 = vpop.permute.xlu0 %702
    %705 = vst.msk [vmem:[#allocation2 + $0x8] sm:$0x3] %vm263, %v703
    %v706 = vsel %vm75, %v703, 0
    %708 = vmatprep.subr.mxu0 0.0
    %709 = vmatpush1.msra.mxu0 %v157
    %710 = vmatprep.subr.mxu0 0.0
    %711 = vmatpush1.msra.mxu0 %v158
    %712 = vmatprep.subr.mxu0 0.0
    %713 = vmatpush1.msra.mxu0 %v159
    %714 = vmatprep.subr.mxu0 0.0
    %715 = vmatpush1.msra.mxu0 %v160
    %716 = vmatprep.subr.mxu0 0.0
    %717 = vmatpush1.msra.mxu0 0.0
    %718 = vmatprep.subr.mxu0 0.0
    %719 = vmatpush1.msra.mxu0 0.0
    %720 = vmatprep.subr.mxu0 0.0
    %721 = vmatpush1.msra.mxu0 0.0
    %722 = vmatprep.subr.mxu0 0.0
    %723 = vmatpush1.msra.mxu0 0.0
    %724 = vmatprep.subr.mxu0 0.0
    %725 = vmatpush1.msra.mxu0 0.0
    %726 = vmatprep.subr.mxu0 0.0
    %727 = vmatpush1.msra.mxu0 0.0
    %728 = vmatprep.subr.mxu0 0.0
    %729 = vmatpush1.msra.mxu0 0.0
    %730 = vmatprep.subr.mxu0 0.0
    %731 = vmatpush1.msra.mxu0 0.0
    %732 = vmatprep.subr.mxu0 0.0
    %733 = vmatpush1.msra.mxu0 0.0
    %734 = vmatprep.subr.mxu0 0.0
    %735 = vmatpush1.msra.mxu0 0.0
    %736 = vmatprep.subr.mxu0 0.0
    %737 = vmatpush1.msra.mxu0 0.0
    %738 = vmatprep.subr.mxu0 0.0
    %739 = vmatpush1.msra.mxu0 0.0
    %740 = vmatprep.subr.mxu0 0.0
    %741 = vmatpush1.msra.mxu0 0.0
    %742 = vmatprep.subr.mxu0 0.0
    %743 = vmatpush1.msra.mxu0 0.0
    %744 = vmatprep.subr.mxu0 0.0
    %745 = vmatpush1.msra.mxu0 0.0
    %746 = vmatprep.subr.mxu0 0.0
    %747 = vmatpush1.msra.mxu0 0.0
    %748 = vmatprep.subr.mxu0 0.0
    %749 = vmatpush1.msra.mxu0 0.0
    %750 = vmatprep.subr.mxu0 0.0
    %751 = vmatpush1.msra.mxu0 0.0
    %752 = vmatprep.subr.mxu0 0.0
    %753 = vmatpush1.msra.mxu0 0.0
    %754 = vmatprep.subr.mxu0 0.0
    %755 = vmatpush1.msra.mxu0 0.0
    %756 = vmatprep.subr.mxu0 0.0
    %757 = vmatpush1.msra.mxu0 0.0
    %758 = vmatprep.subr.mxu0 0.0
    %759 = vmatpush1.msra.mxu0 0.0
    %760 = vmatprep.subr.mxu0 0.0
    %761 = vmatpush1.msra.mxu0 0.0
    %762 = vmatprep.subr.mxu0 0.0
    %763 = vmatpush1.msra.mxu0 0.0
    %764 = vmatprep.subr.mxu0 0.0
    %765 = vmatpush1.msra.mxu0 0.0
    %766 = vmatprep.subr.mxu0 0.0
    %767 = vmatpush1.msra.mxu0 0.0
    %768 = vmatprep.subr.mxu0 0.0
    %769 = vmatpush1.msra.mxu0 0.0
    %770 = vmatprep.subr.mxu0 0.0
    %771 = vmatpush1.msra.mxu0 0.0
    %772 = vmatprep.mubr.f32.mxu0 0.0
    %773 = vmatmul.mubr.f32.gmra.mrb[0].mxu0 %v706
    %v774 = vpop.f32.mrb[0].mxu0
    %v775 = vadd.f32 0.0, %v774
    %v776 = vpop.f32.mrb[0].mxu0
    %777 = vdwg.mxu0
    %v779 = vrot.slane %v775, 6
    %v781 = vadd.f32 %v154, %v779
    %v782 = vxor.u32 %v781, 2147483648
    %v783 = vmul.f32 %v782, 1.442695
    %v784 = vpow.pop %v783
    %v785 = vadd.f32 %v784, 1.0
    %v786 = vrcp.pop %v785
    %v787 = vmul.f32 1.0, %v786
    %v788 = vtanh.pop %v781
    %v790 = vrot.slane %v694, 6
    %v792 = vmul.f32 %v787, %v790
    %794 = vrot.lane.b32.xlu0 %v788, 64
    %v795 = vpop.permute.xlu0 %794
    %v797 = vmul.f32 %v787, %v795
    %799 = vrot.lane.b32.xlu0 %v797, 32
    %v800 = vpop.permute.xlu0 %799
    %v802 = vadd.f32 %v792, %v800
    %v803 = vtanh.pop %v802
    %805 = vrot.lane.b32.xlu0 %v803, 64
    %v806 = vpop.permute.xlu0 %805
    %v808 = vmul.f32 %v787, %v806
    %810 = vrot.lane.b32.xlu0 %v808, 32
    %v811 = vpop.permute.xlu0 %810
    %813 = vst.msk [vmem:[#allocation2 + $0x8] sm:$0xc] %vm372, %v811
    %v814 = vrot.slane %v808, 2
    %815 = vrot.lane.b32.xlu0 %v814, 32
    %v816 = vpop.permute.xlu0 %815
    %v817 = vsel %vm75, %v816, 0
    %819 = vmatprep.subr.mxu0 0.0
    %820 = vmatpush1.msra.mxu0 %v157
    %821 = vmatprep.subr.mxu0 0.0
    %822 = vmatpush1.msra.mxu0 %v158
    %823 = vmatprep.subr.mxu0 0.0
    %824 = vmatpush1.msra.mxu0 %v159
    %825 = vmatprep.subr.mxu0 0.0
    %826 = vmatpush1.msra.mxu0 %v160
    %827 = vmatprep.subr.mxu0 0.0
    %828 = vmatpush1.msra.mxu0 0.0
    %829 = vmatprep.subr.mxu0 0.0
    %830 = vmatpush1.msra.mxu0 0.0
    %831 = vmatprep.subr.mxu0 0.0
    %832 = vmatpush1.msra.mxu0 0.0
    %833 = vmatprep.subr.mxu0 0.0
    %834 = vmatpush1.msra.mxu0 0.0
    %835 = vmatprep.subr.mxu0 0.0
    %836 = vmatpush1.msra.mxu0 0.0
    %837 = vmatprep.subr.mxu0 0.0
    %838 = vmatpush1.msra.mxu0 0.0
    %839 = vmatprep.subr.mxu0 0.0
    %840 = vmatpush1.msra.mxu0 0.0
    %841 = vmatprep.subr.mxu0 0.0
    %842 = vmatpush1.msra.mxu0 0.0
    %843 = vmatprep.subr.mxu0 0.0
    %844 = vmatpush1.msra.mxu0 0.0
    %845 = vmatprep.subr.mxu0 0.0
    %846 = vmatpush1.msra.mxu0 0.0
    %847 = vmatprep.subr.mxu0 0.0
    %848 = vmatpush1.msra.mxu0 0.0
    %849 = vmatprep.subr.mxu0 0.0
    %850 = vmatpush1.msra.mxu0 0.0
    %851 = vmatprep.subr.mxu0 0.0
    %852 = vmatpush1.msra.mxu0 0.0
    %853 = vmatprep.subr.mxu0 0.0
    %854 = vmatpush1.msra.mxu0 0.0
    %855 = vmatprep.subr.mxu0 0.0
    %856 = vmatpush1.msra.mxu0 0.0
    %857 = vmatprep.subr.mxu0 0.0
    %858 = vmatpush1.msra.mxu0 0.0
    %859 = vmatprep.subr.mxu0 0.0
    %860 = vmatpush1.msra.mxu0 0.0
    %861 = vmatprep.subr.mxu0 0.0
    %862 = vmatpush1.msra.mxu0 0.0
    %863 = vmatprep.subr.mxu0 0.0
    %864 = vmatpush1.msra.mxu0 0.0
    %865 = vmatprep.subr.mxu0 0.0
    %866 = vmatpush1.msra.mxu0 0.0
    %867 = vmatprep.subr.mxu0 0.0
    %868 = vmatpush1.msra.mxu0 0.0
    %869 = vmatprep.subr.mxu0 0.0
    %870 = vmatpush1.msra.mxu0 0.0
    %871 = vmatprep.subr.mxu0 0.0
    %872 = vmatpush1.msra.mxu0 0.0
    %873 = vmatprep.subr.mxu0 0.0
    %874 = vmatpush1.msra.mxu0 0.0
    %875 = vmatprep.subr.mxu0 0.0
    %876 = vmatpush1.msra.mxu0 0.0
    %877 = vmatprep.subr.mxu0 0.0
    %878 = vmatpush1.msra.mxu0 0.0
    %879 = vmatprep.subr.mxu0 0.0
    %880 = vmatpush1.msra.mxu0 0.0
    %881 = vmatprep.subr.mxu0 0.0
    %882 = vmatpush1.msra.mxu0 0.0
    %883 = vmatprep.mubr.f32.mxu0 0.0
    %884 = vmatmul.mubr.f32.gmra.mrb[0].mxu0 %v817
    %v885 = vpop.f32.mrb[0].mxu0
    %v886 = vadd.f32 0.0, %v885
    %v887 = vpop.f32.mrb[0].mxu0
    %888 = vdwg.mxu0
    %v890 = vrot.slane %v886, 4
    %v892 = vadd.f32 %v154, %v890
    %v893 = vxor.u32 %v892, 2147483648
    %v894 = vmul.f32 %v893, 1.442695
    %v895 = vpow.pop %v894
    %v896 = vadd.f32 %v895, 1.0
    %v897 = vrcp.pop %v896
    %v898 = vmul.f32 1.0, %v897
    %v899 = vtanh.pop %v892
    %v901 = vrot.slane %v802, 6
    %v903 = vmul.f32 %v898, %v901
    %905 = vrot.lane.b32.xlu0 %v899, 64
    %v906 = vpop.permute.xlu0 %905
    %v908 = vmul.f32 %v898, %v906
    %910 = vrot.lane.b32.xlu0 %v908, 32
    %v911 = vpop.permute.xlu0 %910
    %v913 = vadd.f32 %v903, %v911
    %v914 = vtanh.pop %v913
    %916 = vrot.lane.b32.xlu0 %v914, 64
    %v917 = vpop.permute.xlu0 %916
    %v919 = vmul.f32 %v898, %v917
    %921 = vrot.lane.b32.xlu0 %v919, 32
    %v922 = vpop.permute.xlu0 %921
    %924 = vst.msk [vmem:[#allocation2 + $0x8] sm:$0x30] %vm484, %v922
    %v925 = vrot.slane %v919, 4
    %926 = vrot.lane.b32.xlu0 %v925, 32
    %v927 = vpop.permute.xlu0 %926
    %v928 = vsel %vm75, %v927, 0
    %930 = vmatprep.subr.mxu0 0.0
    %931 = vmatpush1.msra.mxu0 %v157
    %932 = vmatprep.subr.mxu0 0.0
    %933 = vmatpush1.msra.mxu0 %v158
    %934 = vmatprep.subr.mxu0 0.0
    %935 = vmatpush1.msra.mxu0 %v159
    %936 = vmatprep.subr.mxu0 0.0
    %937 = vmatpush1.msra.mxu0 %v160
    %938 = vmatprep.subr.mxu0 0.0
    %939 = vmatpush1.msra.mxu0 0.0
    %940 = vmatprep.subr.mxu0 0.0
    %941 = vmatpush1.msra.mxu0 0.0
    %942 = vmatprep.subr.mxu0 0.0
    %943 = vmatpush1.msra.mxu0 0.0
    %944 = vmatprep.subr.mxu0 0.0
    %945 = vmatpush1.msra.mxu0 0.0
    %946 = vmatprep.subr.mxu0 0.0
    %947 = vmatpush1.msra.mxu0 0.0
    %948 = vmatprep.subr.mxu0 0.0
    %949 = vmatpush1.msra.mxu0 0.0
    %950 = vmatprep.subr.mxu0 0.0
    %951 = vmatpush1.msra.mxu0 0.0
    %952 = vmatprep.subr.mxu0 0.0
    %953 = vmatpush1.msra.mxu0 0.0
    %954 = vmatprep.subr.mxu0 0.0
    %955 = vmatpush1.msra.mxu0 0.0
    %956 = vmatprep.subr.mxu0 0.0
    %957 = vmatpush1.msra.mxu0 0.0
    %958 = vmatprep.subr.mxu0 0.0
    %959 = vmatpush1.msra.mxu0 0.0
    %960 = vmatprep.subr.mxu0 0.0
    %961 = vmatpush1.msra.mxu0 0.0
    %962 = vmatprep.subr.mxu0 0.0
    %963 = vmatpush1.msra.mxu0 0.0
    %964 = vmatprep.subr.mxu0 0.0
    %965 = vmatpush1.msra.mxu0 0.0
    %966 = vmatprep.subr.mxu0 0.0
    %967 = vmatpush1.msra.mxu0 0.0
    %968 = vmatprep.subr.mxu0 0.0
    %969 = vmatpush1.msra.mxu0 0.0
    %970 = vmatprep.subr.mxu0 0.0
    %971 = vmatpush1.msra.mxu0 0.0
    %972 = vmatprep.subr.mxu0 0.0
    %973 = vmatpush1.msra.mxu0 0.0
    %974 = vmatprep.subr.mxu0 0.0
    %975 = vmatpush1.msra.mxu0 0.0
    %976 = vmatprep.subr.mxu0 0.0
    %977 = vmatpush1.msra.mxu0 0.0
    %978 = vmatprep.subr.mxu0 0.0
    %979 = vmatpush1.msra.mxu0 0.0
    %980 = vmatprep.subr.mxu0 0.0
    %981 = vmatpush1.msra.mxu0 0.0
    %982 = vmatprep.subr.mxu0 0.0
    %983 = vmatpush1.msra.mxu0 0.0
    %984 = vmatprep.subr.mxu0 0.0
    %985 = vmatpush1.msra.mxu0 0.0
    %986 = vmatprep.subr.mxu0 0.0
    %987 = vmatpush1.msra.mxu0 0.0
    %988 = vmatprep.subr.mxu0 0.0
    %989 = vmatpush1.msra.mxu0 0.0
    %990 = vmatprep.subr.mxu0 0.0
    %991 = vmatpush1.msra.mxu0 0.0
    %992 = vmatprep.subr.mxu0 0.0
    %993 = vmatpush1.msra.mxu0 0.0
    %994 = vmatprep.mubr.f32.mxu0 0.0
    %995 = vmatmul.mubr.f32.gmra.mrb[0].mxu0 %v928
    %v996 = vpop.f32.mrb[0].mxu0
    %v997 = vadd.f32 0.0, %v996
    %v998 = vpop.f32.mrb[0].mxu0
    %999 = vdwg.mxu0
    %v1001 = vrot.slane %v997, 2
    %v1003 = vadd.f32 %v154, %v1001
    %v1004 = vxor.u32 %v1003, 2147483648
    %v1005 = vmul.f32 %v1004, 1.442695
    %v1006 = vpow.pop %v1005
    %v1007 = vadd.f32 %v1006, 1.0
    %v1008 = vrcp.pop %v1007
    %v1009 = vmul.f32 1.0, %v1008
    %v1010 = vtanh.pop %v1003
    %v1012 = vrot.slane %v913, 6
    %v1014 = vmul.f32 %v1009, %v1012
    %1016 = vrot.lane.b32.xlu0 %v1010, 64
    %v1017 = vpop.permute.xlu0 %1016
    %v1019 = vmul.f32 %v1009, %v1017
    %1021 = vrot.lane.b32.xlu0 %v1019, 32
    %v1022 = vpop.permute.xlu0 %1021
    %v1024 = vadd.f32 %v1014, %v1022
    %v1025 = vtanh.pop %v1024
    %1027 = vrot.lane.b32.xlu0 %v1025, 64
    %v1028 = vpop.permute.xlu0 %1027
    %v1030 = vmul.f32 %v1009, %v1028
    %1032 = vrot.lane.b32.xlu0 %v1030, 32
    %v1033 = vpop.permute.xlu0 %1032
    %1035 = vst.msk [vmem:[#allocation2 + $0x8] sm:$0xc0] %vm596, %v1033
    %v1036 = vld [vmem:[%s4] sm:$0xff]
    %v1037 = vld [vmem:[%s4 + $0x8] sm:$0xff]
    %v1038 = vld [vmem:[%s4 + $0x10] sm:$0xff]
    %v1039 = vld [vmem:[%s4 + $0x18] sm:$0xff]
    %v1040 = vld [vmem:[%s5] sm:$0x1]
    %v1042 = vlaneseq
    %v1043 = vshrl.u32 %v1042, 7
    %v1044 = vsub.s32 0, %v1043
    %v1045 = vrot.slane %v1040, %v1044
    %v1047 = vrot.slane %v1030, 6
    %1048 = vrot.lane.b32.xlu0 %v1047, 32
    %v1049 = vpop.permute.xlu0 %1048
    %v1050 = vsel %vm75, %v1049, 0
    %1052 = vmatprep.subr.mxu0 0.0
    %1053 = vmatpush1.msra.mxu0 %v1036
    %1054 = vmatprep.subr.mxu0 0.0
    %1055 = vmatpush1.msra.mxu0 %v1037
    %1056 = vmatprep.subr.mxu0 0.0
    %1057 = vmatpush1.msra.mxu0 %v1038
    %1058 = vmatprep.subr.mxu0 0.0
    %1059 = vmatpush1.msra.mxu0 %v1039
    %1060 = vmatprep.subr.mxu0 0.0
    %1061 = vmatpush1.msra.mxu0 0.0
    %1062 = vmatprep.subr.mxu0 0.0
    %1063 = vmatpush1.msra.mxu0 0.0
    %1064 = vmatprep.subr.mxu0 0.0
    %1065 = vmatpush1.msra.mxu0 0.0
    %1066 = vmatprep.subr.mxu0 0.0
    %1067 = vmatpush1.msra.mxu0 0.0
    %1068 = vmatprep.subr.mxu0 0.0
    %1069 = vmatpush1.msra.mxu0 0.0
    %1070 = vmatprep.subr.mxu0 0.0
    %1071 = vmatpush1.msra.mxu0 0.0
    %1072 = vmatprep.subr.mxu0 0.0
    %1073 = vmatpush1.msra.mxu0 0.0
    %1074 = vmatprep.subr.mxu0 0.0
    %1075 = vmatpush1.msra.mxu0 0.0
    %1076 = vmatprep.subr.mxu0 0.0
    %1077 = vmatpush1.msra.mxu0 0.0
    %1078 = vmatprep.subr.mxu0 0.0
    %1079 = vmatpush1.msra.mxu0 0.0
    %1080 = vmatprep.subr.mxu0 0.0
    %1081 = vmatpush1.msra.mxu0 0.0
    %1082 = vmatprep.subr.mxu0 0.0
    %1083 = vmatpush1.msra.mxu0 0.0
    %1084 = vmatprep.subr.mxu0 0.0
    %1085 = vmatpush1.msra.mxu0 0.0
    %1086 = vmatprep.subr.mxu0 0.0
    %1087 = vmatpush1.msra.mxu0 0.0
    %1088 = vmatprep.subr.mxu0 0.0
    %1089 = vmatpush1.msra.mxu0 0.0
    %1090 = vmatprep.subr.mxu0 0.0
    %1091 = vmatpush1.msra.mxu0 0.0
    %1092 = vmatprep.subr.mxu0 0.0
    %1093 = vmatpush1.msra.mxu0 0.0
    %1094 = vmatprep.subr.mxu0 0.0
    %1095 = vmatpush1.msra.mxu0 0.0
    %1096 = vmatprep.subr.mxu0 0.0
    %1097 = vmatpush1.msra.mxu0 0.0
    %1098 = vmatprep.subr.mxu0 0.0
    %1099 = vmatpush1.msra.mxu0 0.0
    %1100 = vmatprep.subr.mxu0 0.0
    %1101 = vmatpush1.msra.mxu0 0.0
    %1102 = vmatprep.subr.mxu0 0.0
    %1103 = vmatpush1.msra.mxu0 0.0
    %1104 = vmatprep.subr.mxu0 0.0
    %1105 = vmatpush1.msra.mxu0 0.0
    %1106 = vmatprep.subr.mxu0 0.0
    %1107 = vmatpush1.msra.mxu0 0.0
    %1108 = vmatprep.subr.mxu0 0.0
    %1109 = vmatpush1.msra.mxu0 0.0
    %1110 = vmatprep.subr.mxu0 0.0
    %1111 = vmatpush1.msra.mxu0 0.0
    %1112 = vmatprep.subr.mxu0 0.0
    %1113 = vmatpush1.msra.mxu0 0.0
    %1114 = vmatprep.subr.mxu0 0.0
    %1115 = vmatpush1.msra.mxu0 0.0
    %1116 = vmatprep.mubr.f32.mxu0 0.0
    %1117 = vmatmul.mubr.f32.gmra.mrb[0].mxu0 %v1050
    %v1118 = vpop.f32.mrb[0].mxu0
    %v1119 = vadd.f32 %v1045, %v1118
    %v1120 = vpop.f32.mrb[0].mxu0
    %1121 = vdwg.mxu0
    %v1122 = vld [vmem:[%s8] sm:$0xff]
    %v1123 = vld [vmem:[%s8 + $0x8] sm:$0xff]
    %v1124 = vld [vmem:[%s9] sm:$0x1]
    %v1126 = vlaneseq
    %v1127 = vshrl.u32 %v1126, 7
    %v1128 = vsub.s32 0, %v1127
    %v1129 = vrot.slane %v1124, %v1128
    %vm1131 = vcmask 130048
    %v1133 = vsel %vm1131, %v1119, 0
    %1135 = vmatprep.subr.mxu0 0.0
    %1136 = vmatpush1.msra.mxu0 %v1122
    %1137 = vmatprep.subr.mxu0 0.0
    %1138 = vmatpush1.msra.mxu0 %v1123
    %1139 = vmatprep.subr.mxu0 0.0
    %1140 = vmatpush1.msra.mxu0 0.0
    %1141 = vmatprep.subr.mxu0 0.0
    %1142 = vmatpush1.msra.mxu0 0.0
    %1143 = vmatprep.subr.mxu0 0.0
    %1144 = vmatpush1.msra.mxu0 0.0
    %1145 = vmatprep.subr.mxu0 0.0
    %1146 = vmatpush1.msra.mxu0 0.0
    %1147 = vmatprep.subr.mxu0 0.0
    %1148 = vmatpush1.msra.mxu0 0.0
    %1149 = vmatprep.subr.mxu0 0.0
    %1150 = vmatpush1.msra.mxu0 0.0
    %1151 = vmatprep.subr.mxu0 0.0
    %1152 = vmatpush1.msra.mxu0 0.0
    %1153 = vmatprep.subr.mxu0 0.0
    %1154 = vmatpush1.msra.mxu0 0.0
    %1155 = vmatprep.subr.mxu0 0.0
    %1156 = vmatpush1.msra.mxu0 0.0
    %1157 = vmatprep.subr.mxu0 0.0
    %1158 = vmatpush1.msra.mxu0 0.0
    %1159 = vmatprep.subr.mxu0 0.0
    %1160 = vmatpush1.msra.mxu0 0.0
    %1161 = vmatprep.subr.mxu0 0.0
    %1162 = vmatpush1.msra.mxu0 0.0
    %1163 = vmatprep.subr.mxu0 0.0
    %1164 = vmatpush1.msra.mxu0 0.0
    %1165 = vmatprep.subr.mxu0 0.0
    %1166 = vmatpush1.msra.mxu0 0.0
    %1167 = vmatprep.subr.mxu0 0.0
    %1168 = vmatpush1.msra.mxu0 0.0
    %1169 = vmatprep.subr.mxu0 0.0
    %1170 = vmatpush1.msra.mxu0 0.0
    %1171 = vmatprep.subr.mxu0 0.0
    %1172 = vmatpush1.msra.mxu0 0.0
    %1173 = vmatprep.subr.mxu0 0.0
    %1174 = vmatpush1.msra.mxu0 0.0
    %1175 = vmatprep.subr.mxu0 0.0
    %1176 = vmatpush1.msra.mxu0 0.0
    %1177 = vmatprep.subr.mxu0 0.0
    %1178 = vmatpush1.msra.mxu0 0.0
    %1179 = vmatprep.subr.mxu0 0.0
    %1180 = vmatpush1.msra.mxu0 0.0
    %1181 = vmatprep.subr.mxu0 0.0
    %1182 = vmatpush1.msra.mxu0 0.0
    %1183 = vmatprep.subr.mxu0 0.0
    %1184 = vmatpush1.msra.mxu0 0.0
    %1185 = vmatprep.subr.mxu0 0.0
    %1186 = vmatpush1.msra.mxu0 0.0
    %1187 = vmatprep.subr.mxu0 0.0
    %1188 = vmatpush1.msra.mxu0 0.0
    %1189 = vmatprep.subr.mxu0 0.0
    %1190 = vmatpush1.msra.mxu0 0.0
    %1191 = vmatprep.subr.mxu0 0.0
    %1192 = vmatpush1.msra.mxu0 0.0
    %1193 = vmatprep.subr.mxu0 0.0
    %1194 = vmatpush1.msra.mxu0 0.0
    %1195 = vmatprep.subr.mxu0 0.0
    %1196 = vmatpush1.msra.mxu0 0.0
    %1197 = vmatprep.subr.mxu0 0.0
    %1198 = vmatpush1.msra.mxu0 0.0
    %1199 = vmatprep.mubr.f32.mxu0 0.0
    %1200 = vmatmul.mubr.f32.gmra.mrb[0].mxu0 %v1133
    %v1201 = vpop.f32.mrb[0].mxu0
    %v1202 = vadd.f32 %v1129, %v1201
    %v1203 = vpop.f32.mrb[0].mxu0
    %1204 = vdwg.mxu0
    %v1205 = vld [vmem:[#allocation2] sm:$0xff]
    %v1206 = vld [vmem:[#allocation2 + $0x8] sm:$0xff]
    %v1207 = vld [vmem:[%s6] sm:$0xff]
    %v1208 = vld [vmem:[%s6 + $0x8] sm:$0xff]
    %v1209 = vld [vmem:[%s6 + $0x10] sm:$0xff]
    %v1210 = vld [vmem:[%s6 + $0x18] sm:$0xff]
    %v1211 = vld [vmem:[%s7] sm:$0x1]
    %v1213 = vlaneseq
    %v1214 = vshrl.u32 %v1213, 7
    %v1215 = vsub.s32 0, %v1214
    %v1216 = vrot.slane %v1211, %v1215
    %v1219 = vsel %vm75, %v1205, 0
    %v1222 = vsel %vm75, %v1206, 0
    %1224 = vmatprep.subr.mxu0 0.0
    %1225 = vmatpush1.msra.mxu0 %v1207
    %1226 = vmatprep.subr.mxu0 0.0
    %1227 = vmatpush1.msra.mxu0 %v1208
    %1228 = vmatprep.subr.mxu0 0.0
    %1229 = vmatpush1.msra.mxu0 %v1209
    %1230 = vmatprep.subr.mxu0 0.0
    %1231 = vmatpush1.msra.mxu0 %v1210
    %1232 = vmatprep.subr.mxu0 0.0
    %1233 = vmatpush1.msra.mxu0 0.0
    %1234 = vmatprep.subr.mxu0 0.0
    %1235 = vmatpush1.msra.mxu0 0.0
    %1236 = vmatprep.subr.mxu0 0.0
    %1237 = vmatpush1.msra.mxu0 0.0
    %1238 = vmatprep.subr.mxu0 0.0
    %1239 = vmatpush1.msra.mxu0 0.0
    %1240 = vmatprep.subr.mxu0 0.0
    %1241 = vmatpush1.msra.mxu0 0.0
    %1242 = vmatprep.subr.mxu0 0.0
    %1243 = vmatpush1.msra.mxu0 0.0
    %1244 = vmatprep.subr.mxu0 0.0
    %1245 = vmatpush1.msra.mxu0 0.0
    %1246 = vmatprep.subr.mxu0 0.0
    %1247 = vmatpush1.msra.mxu0 0.0
    %1248 = vmatprep.subr.mxu0 0.0
    %1249 = vmatpush1.msra.mxu0 0.0
    %1250 = vmatprep.subr.mxu0 0.0
    %1251 = vmatpush1.msra.mxu0 0.0
    %1252 = vmatprep.subr.mxu0 0.0
    %1253 = vmatpush1.msra.mxu0 0.0
    %1254 = vmatprep.subr.mxu0 0.0
    %1255 = vmatpush1.msra.mxu0 0.0
    %1256 = vmatprep.subr.mxu0 0.0
    %1257 = vmatpush1.msra.mxu0 0.0
    %1258 = vmatprep.subr.mxu0 0.0
    %1259 = vmatpush1.msra.mxu0 0.0
    %1260 = vmatprep.subr.mxu0 0.0
    %1261 = vmatpush1.msra.mxu0 0.0
    %1262 = vmatprep.subr.mxu0 0.0
    %1263 = vmatpush1.msra.mxu0 0.0
    %1264 = vmatprep.subr.mxu0 0.0
    %1265 = vmatpush1.msra.mxu0 0.0
    %1266 = vmatprep.subr.mxu0 0.0
    %1267 = vmatpush1.msra.mxu0 0.0
    %1268 = vmatprep.subr.mxu0 0.0
    %1269 = vmatpush1.msra.mxu0 0.0
    %1270 = vmatprep.subr.mxu0 0.0
    %1271 = vmatpush1.msra.mxu0 0.0
    %1272 = vmatprep.subr.mxu0 0.0
    %1273 = vmatpush1.msra.mxu0 0.0
    %1274 = vmatprep.subr.mxu0 0.0
    %1275 = vmatpush1.msra.mxu0 0.0
    %1276 = vmatprep.subr.mxu0 0.0
    %1277 = vmatpush1.msra.mxu0 0.0
    %1278 = vmatprep.subr.mxu0 0.0
    %1279 = vmatpush1.msra.mxu0 0.0
    %1280 = vmatprep.subr.mxu0 0.0
    %1281 = vmatpush1.msra.mxu0 0.0
    %1282 = vmatprep.subr.mxu0 0.0
    %1283 = vmatpush1.msra.mxu0 0.0
    %1284 = vmatprep.subr.mxu0 0.0
    %1285 = vmatpush1.msra.mxu0 0.0
    %1286 = vmatprep.subr.mxu0 0.0
    %1287 = vmatpush1.msra.mxu0 0.0
    %1288 = vmatprep.mubr.f32.mxu0 0.0
    %1289 = vmatmul.mubr.f32.gmra.mrb[0].mxu0 %v1219
    %v1290 = vpop.f32.mrb[0].mxu0
    %v1291 = vadd.f32 %v1216, %v1290
    %v1292 = vpop.f32.mrb[0].mxu0
    %1293 = vmatprep.mubr.f32.mxu0 0.0
    %1294 = vmatmul.mubr.f32.gmra.mrb[0].mxu0 %v1222
    %v1295 = vpop.f32.mrb[0].mxu0
    %v1296 = vadd.f32 %v1216, %v1295
    %v1297 = vpop.f32.mrb[0].mxu0
    %1298 = vdwg.mxu0
    %v1299 = vld [vmem:[%s15] sm:$0xff]
    %v1300 = vld [vmem:[%s15 + $0x8] sm:$0xff]
    %vm1301 = vcmask 15360
    %v1303 = vsel %vm1301, %v1299, 0
    %v1306 = vsel %vm1301, %v1300, 0
    %vm1308 = vcmask 1041408
    %v1310 = vsel %vm1308, %v1202, 0
    %1312 = vmatprep.subr.mxu0 0.0
    %1313 = vmatpush1.msra.mxu0 %v1310
    %1314 = vmatprep.subr.mxu0 0.0
    %1315 = vmatpush1.msra.mxu0 0.0
    %1316 = vmatprep.subr.mxu0 0.0
    %1317 = vmatpush1.msra.mxu0 0.0
    %1318 = vmatprep.subr.mxu0 0.0
    %1319 = vmatpush1.msra.mxu0 0.0
    %1320 = vmatprep.subr.mxu0 0.0
    %1321 = vmatpush1.msra.mxu0 0.0
    %1322 = vmatprep.subr.mxu0 0.0
    %1323 = vmatpush1.msra.mxu0 0.0
    %1324 = vmatprep.subr.mxu0 0.0
    %1325 = vmatpush1.msra.mxu0 0.0
    %1326 = vmatprep.subr.mxu0 0.0
    %1327 = vmatpush1.msra.mxu0 0.0
    %1328 = vmatprep.subr.mxu0 0.0
    %1329 = vmatpush1.msra.mxu0 0.0
    %1330 = vmatprep.subr.mxu0 0.0
    %1331 = vmatpush1.msra.mxu0 0.0
    %1332 = vmatprep.subr.mxu0 0.0
    %1333 = vmatpush1.msra.mxu0 0.0
    %1334 = vmatprep.subr.mxu0 0.0
    %1335 = vmatpush1.msra.mxu0 0.0
    %1336 = vmatprep.subr.mxu0 0.0
    %1337 = vmatpush1.msra.mxu0 0.0
    %1338 = vmatprep.subr.mxu0 0.0
    %1339 = vmatpush1.msra.mxu0 0.0
    %1340 = vmatprep.subr.mxu0 0.0
    %1341 = vmatpush1.msra.mxu0 0.0
    %1342 = vmatprep.subr.mxu0 0.0
    %1343 = vmatpush1.msra.mxu0 0.0
    %1344 = vmatprep.subr.mxu0 0.0
    %1345 = vmatpush1.msra.mxu0 0.0
    %1346 = vmatprep.subr.mxu0 0.0
    %1347 = vmatpush1.msra.mxu0 0.0
    %1348 = vmatprep.subr.mxu0 0.0
    %1349 = vmatpush1.msra.mxu0 0.0
    %1350 = vmatprep.subr.mxu0 0.0
    %1351 = vmatpush1.msra.mxu0 0.0
    %1352 = vmatprep.subr.mxu0 0.0
    %1353 = vmatpush1.msra.mxu0 0.0
    %1354 = vmatprep.subr.mxu0 0.0
    %1355 = vmatpush1.msra.mxu0 0.0
    %1356 = vmatprep.subr.mxu0 0.0
    %1357 = vmatpush1.msra.mxu0 0.0
    %1358 = vmatprep.subr.mxu0 0.0
    %1359 = vmatpush1.msra.mxu0 0.0
    %1360 = vmatprep.subr.mxu0 0.0
    %1361 = vmatpush1.msra.mxu0 0.0
    %1362 = vmatprep.subr.mxu0 0.0
    %1363 = vmatpush1.msra.mxu0 0.0
    %1364 = vmatprep.subr.mxu0 0.0
    %1365 = vmatpush1.msra.mxu0 0.0
    %1366 = vmatprep.subr.mxu0 0.0
    %1367 = vmatpush1.msra.mxu0 0.0
    %1368 = vmatprep.subr.mxu0 0.0
    %1369 = vmatpush1.msra.mxu0 0.0
    %1370 = vmatprep.subr.mxu0 0.0
    %1371 = vmatpush1.msra.mxu0 0.0
    %1372 = vmatprep.subr.mxu0 0.0
    %1373 = vmatpush1.msra.mxu0 0.0
    %1374 = vmatprep.subr.mxu0 0.0
    %1375 = vmatpush1.msra.mxu0 0.0
    %1376 = vmatprep.mubr.f32.mxu0 0.0
    %1377 = vmatmul.mubr.f32.gmra.mrb[0].mxu0 %v1303
    %v1378 = vpop.f32.mrb[0].mxu0
    %v1379 = vadd.f32 0.0, %v1378
    %v1380 = vpop.f32.mrb[0].mxu0
    %1381 = vmatprep.mubr.f32.mxu0 0.0
    %1382 = vmatmul.mubr.f32.gmra.mrb[0].mxu0 %v1306
    %v1383 = vpop.f32.mrb[0].mxu0
    %v1384 = vadd.f32 0.0, %v1383
    %v1385 = vpop.f32.mrb[0].mxu0
    %1386 = vdwg.mxu0
    %v1387 = vadd.f32 %v1291, %v1379
    %v1388 = vadd.f32 %v1296, %v1384
    %v1389 = vtanh.pop %v1387
    %v1390 = vtanh.pop %v1388
    %v1391 = vld [vmem:[%s10] sm:$0x1]
    %v1393 = vlaneseq
    %v1394 = vshrl.u32 %v1393, 7
    %v1395 = vsub.s32 0, %v1394
    %v1396 = vrot.slane %v1391, %v1395
    %v1398 = vmul.f32 %v1389, %v1396
    %v1399 = vmul.f32 %v1390, %v1396
    %v1400 = vsel %vm1131, %v1398, 0.0
    %1401 = vadd.xlane.f32.xlu0 %v1400
    %v1402 = vpop.xlane.xlu0 %1401
    %v1403 = vsel %vm1131, %v1399, 0.0
    %1404 = vadd.xlane.f32.xlu0 %v1403
    %v1405 = vpop.xlane.xlu0 %1404
    %v1406 = vld [vmem:[#allocation3] sm:$0x1]
    %v1408 = vlaneseq
    %v1409 = vshrl.u32 %v1408, 7
    %v1410 = vsub.s32 0, %v1409
    %v1411 = vrot.slane %v1406, %v1410
    %v1413 = vadd.f32 %v1402, %v1411
    %v1414 = vadd.f32 %v1405, %v1411
    %v1415 = vld [vmem:[%s17] sm:$0x3]
    %v1416 = vld [vmem:[%s16] sm:$0xff]
    %v1417 = vld [vmem:[%s16 + $0x8] sm:$0xff]
    %1419 = vset.pattern.permute.xlu0 0
    %1420 = vperm.xlu0 %1419, %v1413
    %v1421 = vpop.permute.xlu0 %1420
    %1424 = vset.pattern.permute.xlu0 0
    %1425 = vperm.xlu0 %1424, %v1414
    %v1426 = vpop.permute.xlu0 %1425
    %v1428 = vmul.f32 %v1421, %v1416
    %v1429 = vmul.f32 %v1426, %v1417
    %v1431 = vsel %vm1131, %v1415, 0
    %1433 = vmatprep.subr.mxu0 0.0
    %1434 = vmatpush1.msra.mxu0 %v1428
    %1435 = vmatprep.subr.mxu0 0.0
    %1436 = vmatpush1.msra.mxu0 %v1429
    %1437 = vmatprep.subr.mxu0 0.0
    %1438 = vmatpush1.msra.mxu0 0.0
    %1439 = vmatprep.subr.mxu0 0.0
    %1440 = vmatpush1.msra.mxu0 0.0
    %1441 = vmatprep.subr.mxu0 0.0
    %1442 = vmatpush1.msra.mxu0 0.0
    %1443 = vmatprep.subr.mxu0 0.0
    %1444 = vmatpush1.msra.mxu0 0.0
    %1445 = vmatprep.subr.mxu0 0.0
    %1446 = vmatpush1.msra.mxu0 0.0
    %1447 = vmatprep.subr.mxu0 0.0
    %1448 = vmatpush1.msra.mxu0 0.0
    %1449 = vmatprep.subr.mxu0 0.0
    %1450 = vmatpush1.msra.mxu0 0.0
    %1451 = vmatprep.subr.mxu0 0.0
    %1452 = vmatpush1.msra.mxu0 0.0
    %1453 = vmatprep.subr.mxu0 0.0
    %1454 = vmatpush1.msra.mxu0 0.0
    %1455 = vmatprep.subr.mxu0 0.0
    %1456 = vmatpush1.msra.mxu0 0.0
    %1457 = vmatprep.subr.mxu0 0.0
    %1458 = vmatpush1.msra.mxu0 0.0
    %1459 = vmatprep.subr.mxu0 0.0
    %1460 = vmatpush1.msra.mxu0 0.0
    %1461 = vmatprep.subr.mxu0 0.0
    %1462 = vmatpush1.msra.mxu0 0.0
    %1463 = vmatprep.subr.mxu0 0.0
    %1464 = vmatpush1.msra.mxu0 0.0
    %1465 = vmatprep.subr.mxu0 0.0
    %1466 = vmatpush1.msra.mxu0 0.0
    %1467 = vmatprep.subr.mxu0 0.0
    %1468 = vmatpush1.msra.mxu0 0.0
    %1469 = vmatprep.subr.mxu0 0.0
    %1470 = vmatpush1.msra.mxu0 0.0
    %1471 = vmatprep.subr.mxu0 0.0
    %1472 = vmatpush1.msra.mxu0 0.0
    %1473 = vmatprep.subr.mxu0 0.0
    %1474 = vmatpush1.msra.mxu0 0.0
    %1475 = vmatprep.subr.mxu0 0.0
    %1476 = vmatpush1.msra.mxu0 0.0
    %1477 = vmatprep.subr.mxu0 0.0
    %1478 = vmatpush1.msra.mxu0 0.0
    %1479 = vmatprep.subr.mxu0 0.0
    %1480 = vmatpush1.msra.mxu0 0.0
    %1481 = vmatprep.subr.mxu0 0.0
    %1482 = vmatpush1.msra.mxu0 0.0
    %1483 = vmatprep.subr.mxu0 0.0
    %1484 = vmatpush1.msra.mxu0 0.0
    %1485 = vmatprep.subr.mxu0 0.0
    %1486 = vmatpush1.msra.mxu0 0.0
    %1487 = vmatprep.subr.mxu0 0.0
    %1488 = vmatpush1.msra.mxu0 0.0
    %1489 = vmatprep.subr.mxu0 0.0
    %1490 = vmatpush1.msra.mxu0 0.0
    %1491 = vmatprep.subr.mxu0 0.0
    %1492 = vmatpush1.msra.mxu0 0.0
    %1493 = vmatprep.subr.mxu0 0.0
    %1494 = vmatpush1.msra.mxu0 0.0
    %1495 = vmatprep.subr.mxu0 0.0
    %1496 = vmatpush1.msra.mxu0 0.0
    %1497 = vmatprep.mubr.f32.mxu0 0.0
    %1498 = vmatmul.mubr.f32.gmra.mrb[0].mxu0 %v1431
    %v1499 = vpop.f32.mrb[0].mxu0
    %v1500 = vadd.f32 0.0, %v1499
    %v1501 = vpop.f32.mrb[0].mxu0
    %1502 = vdwg.mxu0
    %vm1503 = vcmask 58368
    %v1504 = vsel %vm1503, %v1500, -inf
    %1505 = vmax.xlane.f32.xlu0 %v1504
    %v1506 = vpop.xlane.xlu0 %1505
    %v1507 = vsub.f32 %v1500, %v1506
    %v1508 = vmul.f32 %v1507, 1.442695
    %v1509 = vpow.pop %v1508
    %v1510 = vsel %vm1503, %v1509, 0.0
    %1511 = vadd.xlane.f32.xlu0 %v1510
    %v1512 = vpop.xlane.xlu0 %1511
    %v1513 = vrcp.pop %v1512
    %v1514 = vmul.f32 %v1509, %v1513
    %v1515 = vld [vmem:[#allocation2] sm:$0x3]
    %1517 = vset.pattern.permute.xlu0 0
    %1518 = vperm.xlu0 %1517, %v1514
    %v1519 = vpop.permute.xlu0 %1518
    %v1521 = vmul.f32 %v1519, %v1515
    %v1522 = vadd.f32 %v1521, 0.0
    %v1523 = vld [vmem:[#allocation2 + $0x2] sm:$0x3]
    %1524 = vset.pattern.permute.xlu0 1
    %1525 = vperm.xlu0 %1524, %v1514
    %v1526 = vpop.permute.xlu0 %1525
    %v1528 = vmul.f32 %v1526, %v1523
    %v1529 = vadd.f32 %v1522, %v1528
    %v1530 = vld [vmem:[#allocation2 + $0x4] sm:$0x3]
    %1531 = vset.pattern.permute.xlu0 2
    %1532 = vperm.xlu0 %1531, %v1514
    %v1533 = vpop.permute.xlu0 %1532
    %v1535 = vmul.f32 %v1533, %v1530
    %v1536 = vadd.f32 %v1529, %v1535
    %v1537 = vld [vmem:[#allocation2 + $0x6] sm:$0x3]
    %1538 = vset.pattern.permute.xlu0 3
    %1539 = vperm.xlu0 %1538, %v1514
    %v1540 = vpop.permute.xlu0 %1539
    %v1542 = vmul.f32 %v1540, %v1537
    %v1543 = vadd.f32 %v1536, %v1542
    %v1544 = vld [vmem:[#allocation2 + $0x8] sm:$0x3]
    %1545 = vset.pattern.permute.xlu0 4
    %1546 = vperm.xlu0 %1545, %v1514
    %v1547 = vpop.permute.xlu0 %1546
    %v1549 = vmul.f32 %v1547, %v1544
    %v1550 = vadd.f32 %v1543, %v1549
    %v1551 = vld [vmem:[#allocation2 + $0xa] sm:$0x3]
    %1552 = vset.pattern.permute.xlu0 5
    %1553 = vperm.xlu0 %1552, %v1514
    %v1554 = vpop.permute.xlu0 %1553
    %v1556 = vmul.f32 %v1554, %v1551
    %v1557 = vadd.f32 %v1550, %v1556
    %v1558 = vld [vmem:[#allocation2 + $0xc] sm:$0x3]
    %1559 = vset.pattern.permute.xlu0 6
    %1560 = vperm.xlu0 %1559, %v1514
    %v1561 = vpop.permute.xlu0 %1560
    %v1563 = vmul.f32 %v1561, %v1558
    %v1564 = vadd.f32 %v1557, %v1563
    %v1565 = vld [vmem:[#allocation2 + $0xe] sm:$0x3]
    %1566 = vset.pattern.permute.xlu0 7
    %1567 = vperm.xlu0 %1566, %v1514
    %v1568 = vpop.permute.xlu0 %1567
    %v1570 = vmul.f32 %v1568, %v1565
    %v1571 = vadd.f32 %v1564, %v1570
    %v1572 = vld [vmem:[%s12] sm:$0xff]
    %v1573 = vld [vmem:[%s12 + $0x8] sm:$0xff]
    %v1574 = vld [vmem:[%s13] sm:$0xff]
    %v1575 = vld [vmem:[%s13 + $0x8] sm:$0xff]
    %v1576 = vld [vmem:[%s13 + $0x10] sm:$0xff]
    %v1577 = vld [vmem:[%s13 + $0x18] sm:$0xff]
    %v1579 = vsel %vm75, %v1571, 0
    %1581 = vmatprep.subr.mxu0 0.0
    %1582 = vmatpush1.msra.mxu0 %v1574
    %1583 = vmatprep.subr.mxu0 0.0
    %1584 = vmatpush1.msra.mxu0 %v1575
    %1585 = vmatprep.subr.mxu0 0.0
    %1586 = vmatpush1.msra.mxu0 %v1576
    %1587 = vmatprep.subr.mxu0 0.0
    %1588 = vmatpush1.msra.mxu0 %v1577
    %1589 = vmatprep.subr.mxu0 0.0
    %1590 = vmatpush1.msra.mxu0 0.0
    %1591 = vmatprep.subr.mxu0 0.0
    %1592 = vmatpush1.msra.mxu0 0.0
    %1593 = vmatprep.subr.mxu0 0.0
    %1594 = vmatpush1.msra.mxu0 0.0
    %1595 = vmatprep.subr.mxu0 0.0
    %1596 = vmatpush1.msra.mxu0 0.0
    %1597 = vmatprep.subr.mxu0 0.0
    %1598 = vmatpush1.msra.mxu0 0.0
    %1599 = vmatprep.subr.mxu0 0.0
    %1600 = vmatpush1.msra.mxu0 0.0
    %1601 = vmatprep.subr.mxu0 0.0
    %1602 = vmatpush1.msra.mxu0 0.0
    %1603 = vmatprep.subr.mxu0 0.0
    %1604 = vmatpush1.msra.mxu0 0.0
    %1605 = vmatprep.subr.mxu0 0.0
    %1606 = vmatpush1.msra.mxu0 0.0
    %1607 = vmatprep.subr.mxu0 0.0
    %1608 = vmatpush1.msra.mxu0 0.0
    %1609 = vmatprep.subr.mxu0 0.0
    %1610 = vmatpush1.msra.mxu0 0.0
    %1611 = vmatprep.subr.mxu0 0.0
    %1612 = vmatpush1.msra.mxu0 0.0
    %1613 = vmatprep.subr.mxu0 0.0
    %1614 = vmatpush1.msra.mxu0 0.0
    %1615 = vmatprep.subr.mxu0 0.0
    %1616 = vmatpush1.msra.mxu0 0.0
    %1617 = vmatprep.subr.mxu0 0.0
    %1618 = vmatpush1.msra.mxu0 0.0
    %1619 = vmatprep.subr.mxu0 0.0
    %1620 = vmatpush1.msra.mxu0 0.0
    %1621 = vmatprep.subr.mxu0 0.0
    %1622 = vmatpush1.msra.mxu0 0.0
    %1623 = vmatprep.subr.mxu0 0.0
    %1624 = vmatpush1.msra.mxu0 0.0
    %1625 = vmatprep.subr.mxu0 0.0
    %1626 = vmatpush1.msra.mxu0 0.0
    %1627 = vmatprep.subr.mxu0 0.0
    %1628 = vmatpush1.msra.mxu0 0.0
    %1629 = vmatprep.subr.mxu0 0.0
    %1630 = vmatpush1.msra.mxu0 0.0
    %1631 = vmatprep.subr.mxu0 0.0
    %1632 = vmatpush1.msra.mxu0 0.0
    %1633 = vmatprep.subr.mxu0 0.0
    %1634 = vmatpush1.msra.mxu0 0.0
    %1635 = vmatprep.subr.mxu0 0.0
    %1636 = vmatpush1.msra.mxu0 0.0
    %1637 = vmatprep.subr.mxu0 0.0
    %1638 = vmatpush1.msra.mxu0 0.0
    %1639 = vmatprep.subr.mxu0 0.0
    %1640 = vmatpush1.msra.mxu0 0.0
    %1641 = vmatprep.subr.mxu0 0.0
    %1642 = vmatpush1.msra.mxu0 0.0
    %1643 = vmatprep.subr.mxu0 0.0
    %1644 = vmatpush1.msra.mxu0 0.0
    %1645 = vmatprep.mubr.f32.mxu0 0.0
    %1646 = vmatmul.mubr.f32.gmra.mrb[0].mxu0 %v1579
    %v1647 = vpop.f32.mrb[0].mxu0
    %v1648 = vadd.f32 0.0, %v1647
    %v1649 = vpop.f32.mrb[0].mxu0
    %1650 = vdwg.mxu0
    %1651 = vmatprep.subr.mxu0 0.0
    %1652 = vmatpush1.msra.mxu0 %v1572
    %1653 = vmatprep.subr.mxu0 0.0
    %1654 = vmatpush1.msra.mxu0 %v1573
    %1655 = vmatprep.subr.mxu0 0.0
    %1656 = vmatpush1.msra.mxu0 0.0
    %1657 = vmatprep.subr.mxu0 0.0
    %1658 = vmatpush1.msra.mxu0 0.0
    %1659 = vmatprep.subr.mxu0 0.0
    %1660 = vmatpush1.msra.mxu0 0.0
    %1661 = vmatprep.subr.mxu0 0.0
    %1662 = vmatpush1.msra.mxu0 0.0
    %1663 = vmatprep.subr.mxu0 0.0
    %1664 = vmatpush1.msra.mxu0 0.0
    %1665 = vmatprep.subr.mxu0 0.0
    %1666 = vmatpush1.msra.mxu0 0.0
    %1667 = vmatprep.subr.mxu0 0.0
    %1668 = vmatpush1.msra.mxu0 0.0
    %1669 = vmatprep.subr.mxu0 0.0
    %1670 = vmatpush1.msra.mxu0 0.0
    %1671 = vmatprep.subr.mxu0 0.0
    %1672 = vmatpush1.msra.mxu0 0.0
    %1673 = vmatprep.subr.mxu0 0.0
    %1674 = vmatpush1.msra.mxu0 0.0
    %1675 = vmatprep.subr.mxu0 0.0
    %1676 = vmatpush1.msra.mxu0 0.0
    %1677 = vmatprep.subr.mxu0 0.0
    %1678 = vmatpush1.msra.mxu0 0.0
    %1679 = vmatprep.subr.mxu0 0.0
    %1680 = vmatpush1.msra.mxu0 0.0
    %1681 = vmatprep.subr.mxu0 0.0
    %1682 = vmatpush1.msra.mxu0 0.0
    %1683 = vmatprep.subr.mxu0 0.0
    %1684 = vmatpush1.msra.mxu0 0.0
    %1685 = vmatprep.subr.mxu0 0.0
    %1686 = vmatpush1.msra.mxu0 0.0
    %1687 = vmatprep.subr.mxu0 0.0
    %1688 = vmatpush1.msra.mxu0 0.0
    %1689 = vmatprep.subr.mxu0 0.0
    %1690 = vmatpush1.msra.mxu0 0.0
    %1691 = vmatprep.subr.mxu0 0.0
    %1692 = vmatpush1.msra.mxu0 0.0
    %1693 = vmatprep.subr.mxu0 0.0
    %1694 = vmatpush1.msra.mxu0 0.0
    %1695 = vmatprep.subr.mxu0 0.0
    %1696 = vmatpush1.msra.mxu0 0.0
    %1697 = vmatprep.subr.mxu0 0.0
    %1698 = vmatpush1.msra.mxu0 0.0
    %1699 = vmatprep.subr.mxu0 0.0
    %1700 = vmatpush1.msra.mxu0 0.0
    %1701 = vmatprep.subr.mxu0 0.0
    %1702 = vmatpush1.msra.mxu0 0.0
    %1703 = vmatprep.subr.mxu0 0.0
    %1704 = vmatpush1.msra.mxu0 0.0
    %1705 = vmatprep.subr.mxu0 0.0
    %1706 = vmatpush1.msra.mxu0 0.0
    %1707 = vmatprep.subr.mxu0 0.0
    %1708 = vmatpush1.msra.mxu0 0.0
    %1709 = vmatprep.subr.mxu0 0.0
    %1710 = vmatpush1.msra.mxu0 0.0
    %1711 = vmatprep.subr.mxu0 0.0
    %1712 = vmatpush1.msra.mxu0 0.0
    %1713 = vmatprep.subr.mxu0 0.0
    %1714 = vmatpush1.msra.mxu0 0.0
    %1715 = vmatprep.mubr.f32.mxu0 0.0
    %1716 = vmatmul.mubr.f32.gmra.mrb[0].mxu0 %v1133
    %v1717 = vpop.f32.mrb[0].mxu0
    %v1718 = vadd.f32 %v1648, %v1717
    %v1719 = vpop.f32.mrb[0].mxu0
    %1720 = vdwg.mxu0
    %v1721 = vld [vmem:[%s14] sm:$0x1]
    %v1723 = vlaneseq
    %v1724 = vshrl.u32 %v1723, 7
    %v1725 = vsub.s32 0, %v1724
    %v1726 = vrot.slane %v1721, %v1725
    %v1728 = vadd.f32 %v1718, %v1726
    %v1729 = vxor.u32 %v1728, 2147483648
    %v1730 = vmul.f32 %v1729, 1.442695
    %v1731 = vpow.pop %v1730
    %v1732 = vadd.f32 %v1731, 1.0
    %v1733 = vrcp.pop %v1732
    %v1734 = vmul.f32 1.0, %v1733
    %vm1735 = vcmask 9216
    %1736 = vst.msk [vmem:[#allocation4] sm:$0x3] %vm1735, %v1734
    // Predicated region
    $region74: #{tpu_custom_call.1} parent=1 // pred_check
      _
    $region75: #{tpu_custom_call.1} parent=1 // pred_check_branch
      %1738 = sbr.rel (0) target = $region77
    $region76: #{tpu_custom_call.1} parent=1 // pred_region
      %s1740 = ssub.s32 32, 32
      %1741 = vsyncadd [#allocation5], %s1740
      %s1743 = sshll.u32 [#allocation4], 4
      %s1744 = int_to_ptr.vmem [resolvable:$true] %s1743
      %1746 = dma.vmem_to_hbm [thread:$0]  %s1744, 32, %s18, [#allocation5]
    $region77: #{tpu_custom_call.1} parent=1 // pred_fallthru
      _
    // Predicated region
    $region78: #{tpu_custom_call.1} parent=1 // pred_check
      _
    $region79: #{tpu_custom_call.1} parent=1 // pred_check_branch
      %1748 = sbr.rel (0) target = $region81
    $region80: #{tpu_custom_call.1} parent=1 // pred_region
      %1749 = dma.done [#allocation5], 32
    $region81: #{tpu_custom_call.1} parent=1 // pred_fallthru
      _
    %1750 = vsyncpa [#allocation5], 1

</llo_original>
